<compile_context>
chip_gen: v5e
topology: v5e:2x2
jax: 0.10.0
libtpu: 0.0.40
codegen_flags: <defaults>
</compile_context>

<pallas_src>
import math
from functools import reduce

import jax
import jax.numpy as jnp
from jax.experimental import pallas as pl
from jax.experimental.pallas import tpu as pltpu

CONV_DIM = 32
EPS = 1e-5
K_RAW = 3 * 7 * 7          # 147 im2col features
K_PAD = 160                # padded contraction length
BLOCK_M = 4096             # conv tile along M (columns of the (C, M) output)


def _round_up(x, m):
    return (x + m - 1) // m * m


# ----------------------------- Pallas kernels ------------------------------ #

def _conv_relu_kernel(p_ref, w_ref, b_ref, o_ref):
    # p_ref: (K_PAD, TM) bf16 im2col columns (streamed tile)
    # w_ref: (C, K_PAD)  bf16 weights   (VMEM resident across the grid)
    # b_ref: (C, 1)      f32 bias       (VMEM resident)
    # o_ref: (C, TM)     f32 output     (M on lanes -> unmasked dense stores)
    acc = jnp.dot(w_ref[...], p_ref[...], preferred_element_type=jnp.float32)
    o_ref[...] = jnp.maximum(acc + b_ref[...], 0.0)


def _shift_down(a):
    # out[:, i, :] = a[:, i-1, :], row 0 <- 0  (0 is a safe pool pad post-ReLU)
    return jnp.concatenate([jnp.zeros_like(a[:, :1, :]), a[:, :-1, :]], axis=1)


def _shift_right(a):
    # out[:, :, j] = a[:, :, j-1], col 0 <- 0
    return jnp.concatenate([jnp.zeros_like(a[:, :, :1]), a[:, :, :-1]], axis=2)


def _pool_ln_kernel(q_ref, o_ref):
    # q_ref: (C, 1, 4, Hp, Wp) parity quarters of the conv output y for one image:
    #   q=0: y[2i, 2j]   q=1: y[2i, 2j+1]   q=2: y[2i+1, 2j]   q=3: y[2i+1, 2j+1]
    # o_ref: (1, C, Hp, Wp) pooled + channel-LayerNormed output (NCHW block).
    q = q_ref[...]
    yee = q[:, 0, 0]
    yeo = q[:, 0, 1]
    yoe = q[:, 0, 2]
    yoo = q[:, 0, 3]

    up_e = _shift_down(yoe)           # y[2i-1, 2j]
    up_o = _shift_down(yoo)           # y[2i-1, 2j+1]
    lf_e = _shift_right(yeo)          # y[2i,   2j-1]
    lf_o = _shift_right(yoo)          # y[2i+1, 2j-1]
    ul = _shift_right(up_o)           # y[2i-1, 2j-1]

    pooled = reduce(jnp.maximum, (yee, yeo, yoe, yoo, up_e, up_o, lf_e, lf_o, ul))

    mean = jnp.mean(pooled, axis=0, keepdims=True)            # LN over channels
    var = jnp.mean(jnp.square(pooled - mean), axis=0, keepdims=True)
    out = (pooled - mean) * jax.lax.rsqrt(var + EPS)
    o_ref[...] = out[None].astype(o_ref.dtype)


# --------------------------- pallas_call wrappers --------------------------- #

def conv_relu_pallas(patches_t, w_mat, bias2d, block_m):
    k_pad, m_pad = patches_t.shape
    c = w_mat.shape[0]
    cost = pl.CostEstimate(
        flops=2 * c * k_pad * m_pad,
        transcendentals=0,
        bytes_accessed=patches_t.size * 2 + w_mat.size * 2 + bias2d.size * 4
        + c * m_pad * 4)
    return pl.pallas_call(
        _conv_relu_kernel,
        out_shape=jax.ShapeDtypeStruct((c, m_pad), jnp.float32),
        grid=(m_pad // block_m,),
        in_specs=[
            pl.BlockSpec((k_pad, block_m), lambda j: (0, j)),   # streamed patches
            pl.BlockSpec((c, k_pad), lambda j: (0, 0)),         # resident weight
            pl.BlockSpec((c, 1), lambda j: (0, 0)),             # resident bias
        ],
        out_specs=pl.BlockSpec((c, block_m), lambda j: (0, j)),
        compiler_params=pltpu.CompilerParams(
            dimension_semantics=("parallel",)),
        cost_estimate=cost,
    )(patches_t, w_mat, bias2d)


def pool_ln_pallas(y_quarters):
    c, n, _, hp, wp = y_quarters.shape
    m2 = n * hp * wp
    cost = pl.CostEstimate(
        flops=m2 * c * 16,
        transcendentals=m2,
        bytes_accessed=y_quarters.size * 4 + m2 * c * 4)
    return pl.pallas_call(
        _pool_ln_kernel,
        out_shape=jax.ShapeDtypeStruct((n, c, hp, wp), jnp.float32),
        grid=(n,),
        in_specs=[pl.BlockSpec((c, 1, 4, hp, wp), lambda i: (0, i, 0, 0, 0))],
        out_specs=pl.BlockSpec((1, c, hp, wp), lambda i: (i, 0, 0, 0)),
        compiler_params=pltpu.CompilerParams(
            dimension_semantics=("parallel",)),
        cost_estimate=cost,
    )(y_quarters)


# ------------------------------ forward glue -------------------------------- #

def early_convolution(x_nchw, weight, bias):
    """x_nchw: (N, 3, H, W); weight: (C, 3, 7, 7); bias: (C,). Returns NCHW output."""
    n, cin, h, w = x_nchw.shape
    c = weight.shape[0]
    if h % 4 or w % 4:
        raise ValueError("This kernel requires H and W to be multiples of 4.")
    hc, wc = h // 2, w // 2          # conv output spatial dims
    hp, wp = h // 4, w // 4          # pooled output spatial dims

    # glue: compact bf16 im2col (49 slices), then a parity-ordered, transposed layout.
    #   row   f = ci*49 + kh*7 + kw                 (matches weight.reshape(C, 147))
    #   col   m = (n, qy, qx, i, j): output pixel (2i+qy, 2j+qx)
    xpad = jnp.pad(x_nchw, ((0, 0), (0, 0), (3, 3), (3, 3))).astype(jnp.bfloat16)
    taps = []
    for kh in range(7):
        for kw in range(7):
            taps.append(xpad[:, :, kh:kh + 2 * hc:2, kw:kw + 2 * wc:2])  # (N,Cin,Hc,Wc)
    patches = jnp.stack(taps, axis=0)                  # (49, N, Cin, Hc, Wc)
    patches = patches.transpose(2, 0, 1, 3, 4)         # (Cin, 49, N, Hc, Wc)
    patches = patches.reshape(cin * 49, n, hp, 2, wp, 2)
    patches = patches.transpose(0, 1, 3, 5, 2, 4)      # (K, N, qy, qx, Hp, Wp)
    patches_t = patches.reshape(cin * 49, n * 4 * hp * wp)

    m = patches_t.shape[1]
    block_m = min(BLOCK_M, _round_up(m, 128))
    m_pad = _round_up(m, block_m)
    patches_t = jnp.pad(patches_t, ((0, K_PAD - cin * 49), (0, m_pad - m)))
    w_mat = jnp.pad(weight.reshape(c, cin * 49).astype(jnp.bfloat16),
                    ((0, 0), (0, K_PAD - cin * 49)))
    bias2d = bias.reshape(c, 1).astype(jnp.float32)

    # Pallas kernel 1: conv-as-matmul + bias + ReLU, lane-dense (C, M) output.
    y = conv_relu_pallas(patches_t, w_mat, bias2d, block_m)
    y = y[:, :m].reshape(c, n, 4, hp, wp)       # free row-major view: parity quarters

    # Pallas kernel 2: 3x3/s2 max-pool + channel LayerNorm, writes NCHW directly.
    return pool_ln_pallas(y)


# --------------------------- pure-JAX reference ------------------------------ #

def reference(x_nchw, weight, bias):
    y = jax.lax.conv_general_dilated(
        x_nchw, weight, window_strides=(2, 2), padding=((3, 3), (3, 3)),
        dimension_numbers=("NCHW", "OIHW", "NCHW"),
        precision=jax.lax.Precision.HIGHEST)
    y = y + bias[None, :, None, None]
    y = jnp.maximum(y, 0.0)
    y = jax.lax.reduce_window(
        y, -jnp.inf, jax.lax.max,
        window_dimensions=(1, 1, 3, 3), window_strides=(1, 1, 2, 2),
        padding=((0, 0), (0, 0), (1, 1), (1, 1)))
    mean = jnp.mean(y, axis=1, keepdims=True)
    var = jnp.mean((y - mean) ** 2, axis=1, keepdims=True)
    return (y - mean) / jnp.sqrt(var + EPS)


# ---------------------------------- main ------------------------------------ #

if __name__ == "__main__":
    key = jax.random.PRNGKey(0)
    kx, kwt, kb = jax.random.split(key, 3)

    N, H, W = 2, 16, 16
    x = jax.random.normal(kx, (N, 3, H, W), dtype=jnp.float32)

    # deterministic param init mimicking the module's __init__ (kaiming fan_out)
    fan_out = CONV_DIM * 7 * 7
    std = math.sqrt(2.0 / fan_out)
    weight = std * jax.random.normal(kwt, (CONV_DIM, 3, 7, 7), dtype=jnp.float32)
    fan_in = 3 * 7 * 7
    bound = 1.0 / math.sqrt(fan_in)
    bias = jax.random.uniform(kb, (CONV_DIM,), minval=-bound, maxval=bound,
                              dtype=jnp.float32)

    out = jax.block_until_ready(jax.jit(early_convolution)(x, weight, bias))
    assert out.shape == (N, CONV_DIM, H // 4, W // 4), out.shape

    ref = reference(x, weight, bias)
    max_err = float(jnp.max(jnp.abs(out - ref)))
    if not jnp.allclose(out, ref, atol=5e-2, rtol=5e-2):   # bf16 MXU inputs
        raise AssertionError(f"mismatch vs reference, max_err={max_err}")

    print("KERNEL_OK")
</pallas_src>

<mosaic_0001>
module attributes {stable_mosaic.version = 11 : i64} {
  func.func @_pool_ln_kernel(%arg0: i32, %arg1: memref<32x1x4x4x4xf32, #tpu.memory_space<vmem>>, %arg2: memref<1x32x4x4xf32, #tpu.memory_space<vmem>>) attributes {dimension_semantics = [#tpu.dimension_semantics<parallel>], iteration_bounds = array<i64: 2>, scalar_prefetch = 0 : i64, scratch_operands = 0 : i64, tpu.core_type = #tpu.core_type<tc>, window_params = [{transform_indices = @transform_0, window_bounds = array<i64: 32, 1, 4, 4, 4>}, {transform_indices = @transform_1, window_bounds = array<i64: 1, 32, 4, 4>}]} {
    %c0 = arith.constant 0 : index
    %c0_0 = arith.constant 0 : index
    %c0_1 = arith.constant 0 : index
    %c0_2 = arith.constant 0 : index
    %c0_3 = arith.constant 0 : index
    %0 = vector.load %arg1[%c0, %c0_0, %c0_1, %c0_2, %c0_3] : memref<32x1x4x4x4xf32, #tpu.memory_space<vmem>>, vector<32x1x4x4x4xf32>
    %1 = vector.extract_strided_slice %0 {offsets = [0, 0, 0, 0, 0], sizes = [32, 1, 1, 4, 4], strides = [1, 1, 1, 1, 1]} : vector<32x1x4x4x4xf32> to vector<32x1x1x4x4xf32>
    %2 = vector.shape_cast %1 : vector<32x1x1x4x4xf32> to vector<32x4x4xf32>
    %3 = vector.extract_strided_slice %0 {offsets = [0, 0, 1, 0, 0], sizes = [32, 1, 1, 4, 4], strides = [1, 1, 1, 1, 1]} : vector<32x1x4x4x4xf32> to vector<32x1x1x4x4xf32>
    %4 = vector.shape_cast %3 : vector<32x1x1x4x4xf32> to vector<32x4x4xf32>
    %5 = vector.extract_strided_slice %0 {offsets = [0, 0, 2, 0, 0], sizes = [32, 1, 1, 4, 4], strides = [1, 1, 1, 1, 1]} : vector<32x1x4x4x4xf32> to vector<32x1x1x4x4xf32>
    %6 = vector.shape_cast %5 : vector<32x1x1x4x4xf32> to vector<32x4x4xf32>
    %7 = vector.extract_strided_slice %0 {offsets = [0, 0, 3, 0, 0], sizes = [32, 1, 1, 4, 4], strides = [1, 1, 1, 1, 1]} : vector<32x1x4x4x4xf32> to vector<32x1x1x4x4xf32>
    %8 = vector.shape_cast %7 : vector<32x1x1x4x4xf32> to vector<32x4x4xf32>
    %cst = arith.constant 0.000000e+00 : f32
    %9 = vector.broadcast %cst : f32 to vector<32x1x4xf32>
    %10 = vector.extract_strided_slice %6 {offsets = [0, 0, 0], sizes = [32, 3, 4], strides = [1, 1, 1]} : vector<32x4x4xf32> to vector<32x3x4xf32>
    %11 = tpu.concatenate %9, %10 in 1 : vector<32x1x4xf32>, vector<32x3x4xf32> -> vector<32x4x4xf32>
    %cst_4 = arith.constant 0.000000e+00 : f32
    %12 = vector.broadcast %cst_4 : f32 to vector<32x1x4xf32>
    %13 = vector.extract_strided_slice %8 {offsets = [0, 0, 0], sizes = [32, 3, 4], strides = [1, 1, 1]} : vector<32x4x4xf32> to vector<32x3x4xf32>
    %14 = tpu.concatenate %12, %13 in 1 : vector<32x1x4xf32>, vector<32x3x4xf32> -> vector<32x4x4xf32>
    %cst_5 = arith.constant 0.000000e+00 : f32
    %15 = vector.broadcast %cst_5 : f32 to vector<32x4x1xf32>
    %16 = vector.extract_strided_slice %4 {offsets = [0, 0, 0], sizes = [32, 4, 3], strides = [1, 1, 1]} : vector<32x4x4xf32> to vector<32x4x3xf32>
    %17 = tpu.concatenate %15, %16 in 2 : vector<32x4x1xf32>, vector<32x4x3xf32> -> vector<32x4x4xf32>
    %cst_6 = arith.constant 0.000000e+00 : f32
    %18 = vector.broadcast %cst_6 : f32 to vector<32x4x1xf32>
    %19 = vector.extract_strided_slice %8 {offsets = [0, 0, 0], sizes = [32, 4, 3], strides = [1, 1, 1]} : vector<32x4x4xf32> to vector<32x4x3xf32>
    %20 = tpu.concatenate %18, %19 in 2 : vector<32x4x1xf32>, vector<32x4x3xf32> -> vector<32x4x4xf32>
    %cst_7 = arith.constant 0.000000e+00 : f32
    %21 = vector.broadcast %cst_7 : f32 to vector<32x4x1xf32>
    %22 = vector.extract_strided_slice %14 {offsets = [0, 0, 0], sizes = [32, 4, 3], strides = [1, 1, 1]} : vector<32x4x4xf32> to vector<32x4x3xf32>
    %23 = tpu.concatenate %21, %22 in 2 : vector<32x4x1xf32>, vector<32x4x3xf32> -> vector<32x4x4xf32>
    %24 = arith.maximumf %2, %4 : vector<32x4x4xf32>
    %25 = arith.maximumf %24, %6 : vector<32x4x4xf32>
    %26 = arith.maximumf %25, %8 : vector<32x4x4xf32>
    %27 = arith.maximumf %26, %11 : vector<32x4x4xf32>
    %28 = arith.maximumf %27, %14 : vector<32x4x4xf32>
    %29 = arith.maximumf %28, %17 : vector<32x4x4xf32>
    %30 = arith.maximumf %29, %20 : vector<32x4x4xf32>
    %31 = arith.maximumf %30, %23 : vector<32x4x4xf32>
    %cst_8 = arith.constant dense<0.000000e+00> : vector<4x4xf32>
    %32 = vector.multi_reduction <add>, %31, %cst_8 [0] : vector<32x4x4xf32> to vector<4x4xf32>
    %33 = vector.shape_cast %32 : vector<4x4xf32> to vector<1x4x4xf32>
    %cst_9 = arith.constant 3.200000e+01 : f32
    %34 = vector.broadcast %cst_9 : f32 to vector<1x4x4xf32>
    %35 = arith.divf %33, %34 : vector<1x4x4xf32>
    %36 = vector.broadcast %35 : vector<1x4x4xf32> to vector<32x4x4xf32>
    %37 = arith.subf %31, %36 : vector<32x4x4xf32>
    %38 = arith.mulf %37, %37 : vector<32x4x4xf32>
    %cst_10 = arith.constant dense<0.000000e+00> : vector<4x4xf32>
    %39 = vector.multi_reduction <add>, %38, %cst_10 [0] : vector<32x4x4xf32> to vector<4x4xf32>
    %40 = vector.shape_cast %39 : vector<4x4xf32> to vector<1x4x4xf32>
    %cst_11 = arith.constant 3.200000e+01 : f32
    %41 = vector.broadcast %cst_11 : f32 to vector<1x4x4xf32>
    %42 = arith.divf %40, %41 : vector<1x4x4xf32>
    %43 = vector.broadcast %35 : vector<1x4x4xf32> to vector<32x4x4xf32>
    %44 = arith.subf %31, %43 : vector<32x4x4xf32>
    %cst_12 = arith.constant 9.99999974E-6 : f32
    %45 = vector.broadcast %cst_12 : f32 to vector<1x4x4xf32>
    %46 = arith.addf %42, %45 : vector<1x4x4xf32>
    %47 = math.rsqrt %46 : vector<1x4x4xf32>
    %48 = vector.broadcast %47 : vector<1x4x4xf32> to vector<32x4x4xf32>
    %49 = arith.mulf %44, %48 : vector<32x4x4xf32>
    %50 = vector.shape_cast %49 : vector<32x4x4xf32> to vector<1x32x4x4xf32>
    %c0_13 = arith.constant 0 : index
    %c0_14 = arith.constant 0 : index
    %c0_15 = arith.constant 0 : index
    %c0_16 = arith.constant 0 : index
    %51 = vector.load %arg2[%c0_13, %c0_14, %c0_15, %c0_16] : memref<1x32x4x4xf32, #tpu.memory_space<vmem>>, vector<1x32x4x4xf32>
    tpu.vector_store %arg2[%c0_13, %c0_14, %c0_15, %c0_16], %50 {strides = array<i32>} : memref<1x32x4x4xf32, #tpu.memory_space<vmem>>, vector<1x32x4x4xf32>,
    return
  }
  func.func @transform_0(%arg0: i32) -> (i32, i32, i32, i32, i32) {
    %c0_i32 = arith.constant 0 : i32
    %c0_i32_0 = arith.constant 0 : i32
    %c0_i32_1 = arith.constant 0 : i32
    %c0_i32_2 = arith.constant 0 : i32
    %c0_i32_3 = arith.constant 0 : i32
    return %c0_i32, %arg0, %c0_i32_0, %c0_i32_1, %c0_i32_2 : i32, i32, i32, i32, i32
  }
  func.func @transform_1(%arg0: i32) -> (i32, i32, i32, i32) {
    %c0_i32 = arith.constant 0 : i32
    %c0_i32_0 = arith.constant 0 : i32
    %c0_i32_1 = arith.constant 0 : i32
    %c0_i32_2 = arith.constant 0 : i32
    return %arg0, %c0_i32, %c0_i32_0, %c0_i32_1 : i32, i32, i32, i32
  }
}

module attributes {stable_mosaic.version = 11 : i64} {
  func.func @_conv_relu_kernel(%arg0: i32, %arg1: memref<160x128xbf16, #tpu.memory_space<vmem>>, %arg2: memref<32x160xbf16, #tpu.memory_space<vmem>>, %arg3: memref<32x1xf32, #tpu.memory_space<vmem>>, %arg4: memref<32x128xf32, #tpu.memory_space<vmem>>) attributes {dimension_semantics = [#tpu.dimension_semantics<parallel>], iteration_bounds = array<i64: 1>, scalar_prefetch = 0 : i64, scratch_operands = 0 : i64, tpu.core_type = #tpu.core_type<tc>, window_params = [{transform_indices = @transform_0, window_bounds = array<i64: 160, 128>}, {pipeline_mode = #tpu.pipeline_mode<synchronous>, transform_indices = @transform_1, window_bounds = array<i64: 32, 160>}, {pipeline_mode = #tpu.pipeline_mode<synchronous>, transform_indices = @transform_2, window_bounds = array<i64: 32, 1>}, {transform_indices = @transform_3, window_bounds = array<i64: 32, 128>}]} {
    %c0 = arith.constant 0 : index
    %c0_0 = arith.constant 0 : index
    %0 = vector.load %arg2[%c0, %c0_0] : memref<32x160xbf16, #tpu.memory_space<vmem>>, vector<32x160xbf16>
    %c0_1 = arith.constant 0 : index
    %c0_2 = arith.constant 0 : index
    %1 = vector.load %arg1[%c0_1, %c0_2] : memref<160x128xbf16, #tpu.memory_space<vmem>>, vector<160x128xbf16>
    %cst = arith.constant dense<0.000000e+00> : vector<32x128xf32>
    %2 = tpu.matmul %0, %1, %cst {dimension_numbers = #tpu.dot_dimension_numbers<[1], [0], [0], [1], [0, 0, 1, 1], [], []>} : vector<32x160xbf16>, vector<160x128xbf16>, vector<32x128xf32> -> vector<32x128xf32>
    %c0_3 = arith.constant 0 : index
    %c0_4 = arith.constant 0 : index
    %3 = vector.load %arg3[%c0_3, %c0_4] : memref<32x1xf32, #tpu.memory_space<vmem>>, vector<32x1xf32>
    %4 = vector.broadcast %3 : vector<32x1xf32> to vector<32x128xf32>
    %5 = arith.addf %2, %4 : vector<32x128xf32>
    %cst_5 = arith.constant 0.000000e+00 : f32
    %6 = vector.broadcast %cst_5 : f32 to vector<32x128xf32>
    %7 = arith.maximumf %5, %6 : vector<32x128xf32>
    %c0_6 = arith.constant 0 : index
    %c0_7 = arith.constant 0 : index
    %8 = vector.load %arg4[%c0_6, %c0_7] : memref<32x128xf32, #tpu.memory_space<vmem>>, vector<32x128xf32>
    tpu.vector_store %arg4[%c0_6, %c0_7], %7 {strides = array<i32>} : memref<32x128xf32, #tpu.memory_space<vmem>>, vector<32x128xf32>,
    return
  }
  func.func @transform_0(%arg0: i32) -> (i32, i32) {
    %c0_i32 = arith.constant 0 : i32
    %c0_i32_0 = arith.constant 0 : i32
    return %c0_i32, %arg0 : i32, i32
  }
  func.func @transform_1(%arg0: i32) -> (i32, i32) {
    %c0_i32 = arith.constant 0 : i32
    %c0_i32_0 = arith.constant 0 : i32
    %c0_i32_1 = arith.constant 0 : i32
    return %c0_i32, %c0_i32_0 : i32, i32
  }
  func.func @transform_2(%arg0: i32) -> (i32, i32) {
    %c0_i32 = arith.constant 0 : i32
    %c0_i32_0 = arith.constant 0 : i32
    %c0_i32_1 = arith.constant 0 : i32
    return %c0_i32, %c0_i32_0 : i32, i32
  }
  func.func @transform_3(%arg0: i32) -> (i32, i32) {
    %c0_i32 = arith.constant 0 : i32
    %c0_i32_0 = arith.constant 0 : i32
    return %c0_i32, %arg0 : i32, i32
  }
}

</mosaic_0001>

<llo_original>
// kernel: early_convolution.2
$region0: #{early_convolution.2}
  #allocation0 [shape = 'u32[]', space=smem, size = 0x4, offset = 0x4, fixed_abs, tag = 'smem constant byte address 0x4 - core index']
  #allocation1 [shape = 'u32[72,128]{1,0:T(1,128)}', space=vmem, size = 0x9000, scoped, tag = 'internal scratch']
  %s0 = inlined_call_operand.vmem [shape: bf16[160,128], index: 0, kind: input, shape index: {}]
  %s1 = inlined_call_operand.vmem [shape: bf16[32,160], index: 1, kind: input, shape index: {}]
  %s2 = inlined_call_operand.vmem [shape: f32[32,1], index: 2, kind: input, shape index: {}]
  %s3 = inlined_call_operand.vmem [shape: f32[32,128], index: 3, kind: output, shape index: {}]
  %s4 = sld [smem:[#allocation0]]
  $region22: #{early_convolution.2} parent=0
    _
  %s6 = ssub.s32 1, %s4
  %s7 = scalar_select 0, %s6, %s4
  // Predicated region
  $region2: #{early_convolution.2} parent=0 // pred_check
    _
  $region3: #{early_convolution.2} parent=0 // pred_check_branch
    %9 = sbr.rel (0) target = $region5
  $region4: #{early_convolution.2} parent=0 // pred_region
    _
  $region5: #{early_convolution.2} parent=0 // pred_fallthru
    _
  // Predicated region
  $region6: #{early_convolution.2} parent=0 // pred_check
    _
  $region7: #{early_convolution.2} parent=0 // pred_check_branch
    %11 = sbr.rel (0) target = $region9
  $region8: #{early_convolution.2} parent=0 // pred_region
    _
  $region9: #{early_convolution.2} parent=0 // pred_fallthru
    _
  // Predicated region
  $region10: #{early_convolution.2} parent=0 // pred_check
    _
  $region11: #{early_convolution.2} parent=0 // pred_check_branch
    %13 = sbr.rel (0) target = $region13
  $region12: #{early_convolution.2} parent=0 // pred_region
    _
  $region13: #{early_convolution.2} parent=0 // pred_fallthru
    _
  %v15 = vld [vmem:[%s1] sm:$0xff]
  %v16 = vld [vmem:[%s1 + $0x8] sm:$0xff]
  %v17 = vld [vmem:[%s1 + $0x10] sm:$0xff]
  %v18 = vld [vmem:[%s1 + $0x18] sm:$0xff]
  %v19 = vld [vmem:[%s0] sm:$0xf]
  %v20 = vld [vmem:[%s0 + $0x4] sm:$0xf]
  %v21 = vld [vmem:[%s0 + $0x8] sm:$0xf]
  %v22 = vld [vmem:[%s0 + $0xc] sm:$0xf]
  %v23 = vld [vmem:[%s0 + $0x10] sm:$0xf]
  %v24 = vld [vmem:[%s0 + $0x14] sm:$0xf]
  %v25 = vld [vmem:[%s0 + $0x18] sm:$0xf]
  %v26 = vld [vmem:[%s0 + $0x1c] sm:$0xf]
  %v27 = vld [vmem:[%s0 + $0x20] sm:$0xf]
  %v28 = vld [vmem:[%s0 + $0x24] sm:$0xf]
  %v29 = vld [vmem:[%s0 + $0x28] sm:$0xf]
  %v30 = vld [vmem:[%s0 + $0x2c] sm:$0xf]
  %v31 = vld [vmem:[%s0 + $0x30] sm:$0xf]
  %v32 = vld [vmem:[%s0 + $0x34] sm:$0xf]
  %v33 = vld [vmem:[%s0 + $0x38] sm:$0xf]
  %v34 = vld [vmem:[%s0 + $0x3c] sm:$0xf]
  %v35 = vld [vmem:[%s0 + $0x40] sm:$0xf]
  %v36 = vld [vmem:[%s0 + $0x44] sm:$0xf]
  %v37 = vld [vmem:[%s0 + $0x48] sm:$0xf]
  %v38 = vld [vmem:[%s0 + $0x4c] sm:$0xf]
  %v39 = vld [vmem:[%s2] sm:$0xff]
  %v40 = vld [vmem:[%s2 + $0x8] sm:$0xff]
  %v41 = vld [vmem:[%s2 + $0x10] sm:$0xff]
  %v42 = vld [vmem:[%s2 + $0x18] sm:$0xff]
  %44 = vset.pattern.permute.xlu0 0
  %45 = vperm.xlu0 %44, %v39
  %v46 = vpop.permute.xlu0 %45
  %49 = vset.pattern.permute.xlu0 0
  %50 = vperm.xlu0 %49, %v40
  %v51 = vpop.permute.xlu0 %50
  %54 = vset.pattern.permute.xlu0 0
  %55 = vperm.xlu0 %54, %v41
  %v56 = vpop.permute.xlu0 %55
  %59 = vset.pattern.permute.xlu0 0
  %60 = vperm.xlu0 %59, %v42
  %v61 = vpop.permute.xlu0 %60
  %v67 = vunpack.c.l.b16 %v15
  %v68 = vunpack.c.h.b16 %v15
  %v69 = vunpack.c.l.b16 %v16
  %v70 = vunpack.c.h.b16 %v16
  %v71 = vunpack.c.l.b16 %v17
  %v72 = vunpack.c.h.b16 %v17
  %v73 = vunpack.c.l.b16 %v18
  %v74 = vunpack.c.h.b16 %v18
  %v75 = vpack.c.b16 %v69, %v67
  %v76 = vpack.c.b16 %v70, %v68
  %v77 = vpack.c.b16 %v73, %v71
  %v78 = vpack.c.b16 %v74, %v72
  %v101 = vunpack.c.l.b16 %v19
  %v102 = vunpack.c.l.b16 %v20
  %v103 = vunpack.c.l.b16 %v21
  %v104 = vunpack.c.l.b16 %v22
  %v105 = vunpack.c.l.b16 %v23
  %v106 = vunpack.c.l.b16 %v24
  %v107 = vunpack.c.l.b16 %v25
  %v108 = vunpack.c.l.b16 %v26
  %v109 = vunpack.c.l.b16 %v27
  %v110 = vunpack.c.l.b16 %v28
  %v111 = vunpack.c.l.b16 %v29
  %v112 = vunpack.c.l.b16 %v30
  %v113 = vunpack.c.l.b16 %v31
  %v114 = vunpack.c.l.b16 %v32
  %v115 = vunpack.c.l.b16 %v33
  %v116 = vunpack.c.l.b16 %v34
  %v117 = vunpack.c.l.b16 %v35
  %v118 = vunpack.c.l.b16 %v36
  %v119 = vunpack.c.l.b16 %v37
  %v120 = vunpack.c.l.b16 %v38
  %v121 = vpack.c.b16 %v102, %v101
  %v122 = vpack.c.b16 %v104, %v103
  %v123 = vpack.c.b16 %v106, %v105
  %v124 = vpack.c.b16 %v108, %v107
  %v125 = vpack.c.b16 %v110, %v109
  %v126 = vpack.c.b16 %v112, %v111
  %v127 = vpack.c.b16 %v114, %v113
  %v128 = vpack.c.b16 %v116, %v115
  %v129 = vpack.c.b16 %v118, %v117
  %v130 = vpack.c.b16 %v120, %v119
  %vm141 = vcmask 261120
  %v143 = vsel %vm141, %v76, 0
  %v146 = vsel %vm141, %v78, 0
  %148 = vmatpush.bf16.msra.mxu0 %v128
  %149 = vmatpush.bf16.msra.mxu0 %v127
  %150 = vmatpush.bf16.msra.mxu0 %v126
  %151 = vmatpush.bf16.msra.mxu0 %v125
  %152 = vmatpush.bf16.msra.mxu0 %v124
  %153 = vmatpush.bf16.msra.mxu0 %v123
  %154 = vmatpush.bf16.msra.mxu0 %v122
  %155 = vmatpush.bf16.msra.mxu0 %v121
  %156 = vmatmul.bf16.gmra.mxu0 %v75
  %v157 = vpop.f32.mrf.mxu0
  %v158 = vadd.f32 %v46, %v157
  %v159 = vpop.f32.mrf.mxu0
  %v160 = vadd.f32 %v51, %v159
  %161 = vmatmul.bf16.gmra.mxu0 %v77
  %v162 = vpop.f32.mrf.mxu0
  %v163 = vadd.f32 %v56, %v162
  %v164 = vpop.f32.mrf.mxu0
  %v165 = vadd.f32 %v61, %v164
  %166 = vdwg.mxu0
  %167 = vmatpush.bf16.msra.mxu0 0
  %168 = vmatpush.bf16.msra.mxu0 0
  %169 = vmatpush.bf16.msra.mxu0 0
  %170 = vmatpush.bf16.msra.mxu0 0
  %171 = vmatpush.bf16.msra.mxu0 0
  %172 = vmatpush.bf16.msra.mxu0 0
  %173 = vmatpush.bf16.msra.mxu0 %v130
  %174 = vmatpush.bf16.msra.mxu0 %v129
  %175 = vmatmul.bf16.gmra.mxu0 %v143
  %v176 = vpop.f32.mrf.mxu0
  %v177 = vadd.f32 %v158, %v176
  %v178 = vpop.f32.mrf.mxu0
  %v179 = vadd.f32 %v160, %v178
  %180 = vmatmul.bf16.gmra.mxu0 %v146
  %v181 = vpop.f32.mrf.mxu0
  %v182 = vadd.f32 %v163, %v181
  %v183 = vpop.f32.mrf.mxu0
  %v184 = vadd.f32 %v165, %v183
  %185 = vdwg.mxu0
  %v186 = vmax.f32 %v177, 0.0
  %v187 = vmax.f32 %v179, 0.0
  %v188 = vmax.f32 %v182, 0.0
  %v189 = vmax.f32 %v184, 0.0
  %190 = vst [vmem:[%s3] sm:$0xff] %v186
  %191 = vst [vmem:[%s3 + $0x8] sm:$0xff] %v187
  %192 = vst [vmem:[%s3 + $0x10] sm:$0xff] %v188
  %193 = vst [vmem:[%s3 + $0x18] sm:$0xff] %v189
  // Predicated region
  $region14: #{early_convolution.2} parent=0 // pred_check
    _
  $region15: #{early_convolution.2} parent=0 // pred_check_branch
    %195 = sbr.rel (0) target = $region17
  $region16: #{early_convolution.2} parent=0 // pred_region
    _
  $region17: #{early_convolution.2} parent=0 // pred_fallthru
    _
  // Predicated region
  $region18: #{early_convolution.2} parent=0 // pred_check
    _
  $region19: #{early_convolution.2} parent=0 // pred_check_branch
    %197 = sbr.rel (0) target = $region21
  $region20: #{early_convolution.2} parent=0 // pred_region
    _
  $region21: #{early_convolution.2} parent=0 // pred_fallthru
    _

// kernel: early_convolution.3
$region0: #{early_convolution.3}
  #allocation0 [shape = 'u32[]', space=smem, size = 0x4, offset = 0x4, fixed_abs, tag = 'smem constant byte address 0x4 - core index']
  #allocation1 [shape = 'u32[72,128]{1,0:T(1,128)}', space=vmem, size = 0x9000, scoped, tag = 'internal scratch']
  %s0 = inlined_call_operand.vmem [shape: f32[32,2,4,4,4], index: 0, kind: input, shape index: {}]
  %s1 = inlined_call_operand.vmem [shape: f32[2,32,4,4], index: 1, kind: output, shape index: {}]
  %s2 = sld [smem:[#allocation0]]
  $region78: #{early_convolution.3} parent=0
    _
  %s4 = ssub.s32 1, %s2
  %s5 = scalar_select 0, %s4, %s2
  $region1: #{early_convolution.3} parent=0
    #allocation2 [shape = 'u8[524288]{0}', space=vmem, size = 0x80000, scoped, tag = 'input window, operand 0']
    loop: start=0, step=1, limit=4
    $region2: #{early_convolution.3} parent=1 // loop_pre_header
      _
    $region3: #{early_convolution.3} parent=1 // loop_header
      %s7 = sphi 0, %s11
      %p8 = scmp.ge.s32.totalorder %s7, 4
      %s17 = sphi 0, %s19
      %s20 = sphi 0, %s17
      %s21 = sphi 0, %s20
      %s37 = sphi 0, %s21
      %s43 = sphi 0, %s45
      %s46 = sphi 0, %s43
      %s47 = sphi 0, %s46
      %s63 = sphi 0, %s47
    $region4: #{early_convolution.3} parent=1 // loop_header_branch
      %10 = sbr.rel (%p8) target = $region8
    $region5: #{early_convolution.3} parent=1 // loop_body
      %s12 = ssub.s32 %s7, 1
      %s13 = ssub.s32 %s7, 2
      %s14 = sadd.s32 %s7, 1
      %s15 = ssub.s32 %s7, %s14
      %p16 = scmp.eq.s32.totalorder %s15, 0
      %s18 = sadd.s32 %s17, 1
      %s19 = scalar_select %p16, %s17, %s18
      %p22 = pneg %p16
      %p23 = scmp.eq.s32.totalorder %s7, 1
      %p24 = por %p22, %p23
      %p25 = scmp.ne.s32.totalorder %s17, %s20
      %p26 = scmp.eq.s32.totalorder %s7, 0
      %p27 = por %p25, %p26
      %p28 = scmp.ne.s32.totalorder %s17, %s20
      %p29 = scmp.eq.s32.totalorder %s12, 1
      %p30 = por %p28, %p29
      %p31 = scmp.ne.s32.totalorder %s20, %s21
      %p32 = scmp.eq.s32.totalorder %s12, 0
      %p33 = por %p31, %p32
      %p34 = scmp.ne.s32.totalorder %s20, %s21
      %p35 = scmp.eq.s32.totalorder %s13, 1
      %p36 = por %p34, %p35
      %p38 = scmp.ne.s32.totalorder %s21, %s37
      %p39 = scmp.eq.s32.totalorder %s13, 0
      %p40 = por %p38, %p39
      %s41 = ssub.s32 %s7, %s14
      %p42 = scmp.eq.s32.totalorder %s41, 0
      %s44 = sadd.s32 %s43, 1
      %s45 = scalar_select %p42, %s43, %s44
      %p48 = pneg %p42
      %p49 = scmp.eq.s32.totalorder %s7, 1
      %p50 = por %p48, %p49
      %p51 = scmp.ne.s32.totalorder %s43, %s46
      %p52 = scmp.eq.s32.totalorder %s7, 0
      %p53 = por %p51, %p52
      %p54 = scmp.ne.s32.totalorder %s43, %s46
      %p55 = scmp.eq.s32.totalorder %s12, 1
      %p56 = por %p54, %p55
      %p57 = scmp.ne.s32.totalorder %s46, %s47
      %p58 = scmp.eq.s32.totalorder %s12, 0
      %p59 = por %p57, %p58
      %p60 = scmp.ne.s32.totalorder %s46, %s47
      %p61 = scmp.eq.s32.totalorder %s13, 1
      %p62 = por %p60, %p61
      %p64 = scmp.ne.s32.totalorder %s47, %s63
      %p65 = scmp.eq.s32.totalorder %s13, 0
      %p66 = por %p64, %p65
      %p67 = scmp.le.s32.totalorder 1, %s7
      %p68 = scmp.lt.s32.totalorder %s7, 3
      %p69 = pnand %p67, %p68
      %p70 = pneg %p69
      // Predicated region
      $region9: #{early_convolution.3} parent=5 // pred_check
        _
      $region10: #{early_convolution.3} parent=5 // pred_check_branch
        %72 = sbr.rel (%p69) target = $region12
      $region11: #{early_convolution.3} parent=5 // pred_region
        %s73 = ssub.s32 %s7, 1
      $region12: #{early_convolution.3} parent=5 // pred_fallthru
        _
      %p74 = scmp.lt.s32.totalorder %s7, 2
      // Predicated region
      $region13: #{early_convolution.3} parent=5 // pred_check
        %p75 = pneg %p74
      $region14: #{early_convolution.3} parent=5 // pred_check_branch
        %77 = sbr.rel (%p75) target = $region16
      $region15: #{early_convolution.3} parent=5 // pred_region
        // Predicated region
        $region17: #{early_convolution.3} parent=15 // pred_check
          %p78 = pneg %p27
        $region18: #{early_convolution.3} parent=15 // pred_check_branch
          %80 = sbr.rel (%p78) target = $region20
        $region19: #{early_convolution.3} parent=15 // pred_region
          %s81 = sand.u32 %s17, 1
          %s82 = sand.u32 %s17, 1
          %s83 = smul.addr %s82, 512
          %s84 = scalar_lea.vmem [#allocation2], %s83
          %s85 = smul.addr %s7, 4
          %s86 = smul.addr %s85, 4
          %s87 = scalar_lea.vmem %s0, %s86
          // Predicated region
          $region21: #{early_convolution.3} parent=19 // pred_check
            _
          $region22: #{early_convolution.3} parent=19 // pred_check_branch
            %89 = sbr.rel (0) target = $region24
          $region23: #{early_convolution.3} parent=19 // pred_region
            // Predicated region
            $region25: #{early_convolution.3} parent=23 // pred_check
              _
            $region26: #{early_convolution.3} parent=23 // pred_check_branch
              %91 = sbr.rel target = $region28
            $region27: #{early_convolution.3} parent=23 // pred_region
              // Predicated region
              $region40: #{early_convolution.3} parent=27 // pred_check
                _
              $region41: #{early_convolution.3} parent=27 // pred_check_branch
                %361 = sbr.rel (0) target = $region43
              $region42: #{early_convolution.3} parent=27 // pred_region
                loop: start=0, step=1, limit=1
                $region44: #{early_convolution.3} parent=42 // loop_pre_header
                  _
                $region45: #{early_convolution.3} parent=42 // loop_header
                  %s363 = sphi 0, %s367
                  %p364 = scmp.ge.s32.totalorder %s363, 1
                  %s368 = sphi %s87, %s87
                  %s369 = sphi %s84, %s84
                $region46: #{early_convolution.3} parent=42 // loop_header_branch
                  %366 = sbr.rel (%p364) target = $region50
                $region47: #{early_convolution.3} parent=42 // loop_body
                  _
                $region48: #{early_convolution.3} parent=42 // loop_footer
                  %s367 = sadd.s32 1, %s363
                $region49: #{early_convolution.3} parent=42 // loop_footer_branch
                  %362 = sbr.rel target = $region45
                $region50: #{early_convolution.3} parent=42 // loop_exit
                  _
                %s371 = ssub.s32 16, 1
                loop: start=0, step=1, limit=1
                $region51: #{early_convolution.3} parent=42 // loop_pre_header
                  _
                $region52: #{early_convolution.3} parent=42 // loop_header
                  %s373 = sphi 0, %s377
                  %p374 = scmp.ge.s32.totalorder %s373, 1
                  %s378 = sphi %s87, %s87
                  %s379 = sphi %s84, %s84
                $region53: #{early_convolution.3} parent=42 // loop_header_branch
                  %376 = sbr.rel (%p374) target = $region57
                $region54: #{early_convolution.3} parent=42 // loop_body
                  %v380 = vld [vmem:[%s378] sm:%s371]
                  %381 = vst [vmem:[%s379] sm:%s371] %v380
                  %v382 = vld [vmem:[%s378 + $0x4] sm:%s371]
                  %383 = vst [vmem:[%s379 + $0x4] sm:%s371] %v382
                  %v384 = vld [vmem:[%s378 + $0x8] sm:%s371]
                  %385 = vst [vmem:[%s379 + $0x8] sm:%s371] %v384
                  %v386 = vld [vmem:[%s378 + $0xc] sm:%s371]
                  %387 = vst [vmem:[%s379 + $0xc] sm:%s371] %v386
                  %v388 = vld [vmem:[%s378 + $0x20] sm:%s371]
                  %389 = vst [vmem:[%s379 + $0x10] sm:%s371] %v388
                  %v390 = vld [vmem:[%s378 + $0x24] sm:%s371]
                  %391 = vst [vmem:[%s379 + $0x14] sm:%s371] %v390
                  %v392 = vld [vmem:[%s378 + $0x28] sm:%s371]
                  %393 = vst [vmem:[%s379 + $0x18] sm:%s371] %v392
                  %v394 = vld [vmem:[%s378 + $0x2c] sm:%s371]
                  %395 = vst [vmem:[%s379 + $0x1c] sm:%s371] %v394
                  %v396 = vld [vmem:[%s378 + $0x40] sm:%s371]
                  %397 = vst [vmem:[%s379 + $0x20] sm:%s371] %v396
                  %v398 = vld [vmem:[%s378 + $0x44] sm:%s371]
                  %399 = vst [vmem:[%s379 + $0x24] sm:%s371] %v398
                  %v400 = vld [vmem:[%s378 + $0x48] sm:%s371]
                  %401 = vst [vmem:[%s379 + $0x28] sm:%s371] %v400
                  %v402 = vld [vmem:[%s378 + $0x4c] sm:%s371]
                  %403 = vst [vmem:[%s379 + $0x2c] sm:%s371] %v402
                  %v404 = vld [vmem:[%s378 + $0x60] sm:%s371]
                  %405 = vst [vmem:[%s379 + $0x30] sm:%s371] %v404
                  %v406 = vld [vmem:[%s378 + $0x64] sm:%s371]
                  %407 = vst [vmem:[%s379 + $0x34] sm:%s371] %v406
                  %v408 = vld [vmem:[%s378 + $0x68] sm:%s371]
                  %409 = vst [vmem:[%s379 + $0x38] sm:%s371] %v408
                  %v410 = vld [vmem:[%s378 + $0x6c] sm:%s371]
                  %411 = vst [vmem:[%s379 + $0x3c] sm:%s371] %v410
                  %v412 = vld [vmem:[%s378 + $0x80] sm:%s371]
                  %413 = vst [vmem:[%s379 + $0x40] sm:%s371] %v412
                  %v414 = vld [vmem:[%s378 + $0x84] sm:%s371]
                  %415 = vst [vmem:[%s379 + $0x44] sm:%s371] %v414
                  %v416 = vld [vmem:[%s378 + $0x88] sm:%s371]
                  %417 = vst [vmem:[%s379 + $0x48] sm:%s371] %v416
                  %v418 = vld [vmem:[%s378 + $0x8c] sm:%s371]
                  %419 = vst [vmem:[%s379 + $0x4c] sm:%s371] %v418
                  %v420 = vld [vmem:[%s378 + $0xa0] sm:%s371]
                  %421 = vst [vmem:[%s379 + $0x50] sm:%s371] %v420
                  %v422 = vld [vmem:[%s378 + $0xa4] sm:%s371]
                  %423 = vst [vmem:[%s379 + $0x54] sm:%s371] %v422
                  %v424 = vld [vmem:[%s378 + $0xa8] sm:%s371]
                  %425 = vst [vmem:[%s379 + $0x58] sm:%s371] %v424
                  %v426 = vld [vmem:[%s378 + $0xac] sm:%s371]
                  %427 = vst [vmem:[%s379 + $0x5c] sm:%s371] %v426
                  %v428 = vld [vmem:[%s378 + $0xc0] sm:%s371]
                  %429 = vst [vmem:[%s379 + $0x60] sm:%s371] %v428
                  %v430 = vld [vmem:[%s378 + $0xc4] sm:%s371]
                  %431 = vst [vmem:[%s379 + $0x64] sm:%s371] %v430
                  %v432 = vld [vmem:[%s378 + $0xc8] sm:%s371]
                  %433 = vst [vmem:[%s379 + $0x68] sm:%s371] %v432
                  %v434 = vld [vmem:[%s378 + $0xcc] sm:%s371]
                  %435 = vst [vmem:[%s379 + $0x6c] sm:%s371] %v434
                  %v436 = vld [vmem:[%s378 + $0xe0] sm:%s371]
                  %437 = vst [vmem:[%s379 + $0x70] sm:%s371] %v436
                  %v438 = vld [vmem:[%s378 + $0xe4] sm:%s371]
                  %439 = vst [vmem:[%s379 + $0x74] sm:%s371] %v438
                  %v440 = vld [vmem:[%s378 + $0xe8] sm:%s371]
                  %441 = vst [vmem:[%s379 + $0x78] sm:%s371] %v440
                  %v442 = vld [vmem:[%s378 + $0xec] sm:%s371]
                  %443 = vst [vmem:[%s379 + $0x7c] sm:%s371] %v442
                  %v444 = vld [vmem:[%s378 + $0x100] sm:%s371]
                  %445 = vst [vmem:[%s379 + $0x80] sm:%s371] %v444
                  %v446 = vld [vmem:[%s378 + $0x104] sm:%s371]
                  %447 = vst [vmem:[%s379 + $0x84] sm:%s371] %v446
                  %v448 = vld [vmem:[%s378 + $0x108] sm:%s371]
                  %449 = vst [vmem:[%s379 + $0x88] sm:%s371] %v448
                  %v450 = vld [vmem:[%s378 + $0x10c] sm:%s371]
                  %451 = vst [vmem:[%s379 + $0x8c] sm:%s371] %v450
                  %v452 = vld [vmem:[%s378 + $0x120] sm:%s371]
                  %453 = vst [vmem:[%s379 + $0x90] sm:%s371] %v452
                  %v454 = vld [vmem:[%s378 + $0x124] sm:%s371]
                  %455 = vst [vmem:[%s379 + $0x94] sm:%s371] %v454
                  %v456 = vld [vmem:[%s378 + $0x128] sm:%s371]
                  %457 = vst [vmem:[%s379 + $0x98] sm:%s371] %v456
                  %v458 = vld [vmem:[%s378 + $0x12c] sm:%s371]
                  %459 = vst [vmem:[%s379 + $0x9c] sm:%s371] %v458
                  %v460 = vld [vmem:[%s378 + $0x140] sm:%s371]
                  %461 = vst [vmem:[%s379 + $0xa0] sm:%s371] %v460
                  %v462 = vld [vmem:[%s378 + $0x144] sm:%s371]
                  %463 = vst [vmem:[%s379 + $0xa4] sm:%s371] %v462
                  %v464 = vld [vmem:[%s378 + $0x148] sm:%s371]
                  %465 = vst [vmem:[%s379 + $0xa8] sm:%s371] %v464
                  %v466 = vld [vmem:[%s378 + $0x14c] sm:%s371]
                  %467 = vst [vmem:[%s379 + $0xac] sm:%s371] %v466
                  %v468 = vld [vmem:[%s378 + $0x160] sm:%s371]
                  %469 = vst [vmem:[%s379 + $0xb0] sm:%s371] %v468
                  %v470 = vld [vmem:[%s378 + $0x164] sm:%s371]
                  %471 = vst [vmem:[%s379 + $0xb4] sm:%s371] %v470
                  %v472 = vld [vmem:[%s378 + $0x168] sm:%s371]
                  %473 = vst [vmem:[%s379 + $0xb8] sm:%s371] %v472
                  %v474 = vld [vmem:[%s378 + $0x16c] sm:%s371]
                  %475 = vst [vmem:[%s379 + $0xbc] sm:%s371] %v474
                  %v476 = vld [vmem:[%s378 + $0x180] sm:%s371]
                  %477 = vst [vmem:[%s379 + $0xc0] sm:%s371] %v476
                  %v478 = vld [vmem:[%s378 + $0x184] sm:%s371]
                  %479 = vst [vmem:[%s379 + $0xc4] sm:%s371] %v478
                  %v480 = vld [vmem:[%s378 + $0x188] sm:%s371]
                  %481 = vst [vmem:[%s379 + $0xc8] sm:%s371] %v480
                  %v482 = vld [vmem:[%s378 + $0x18c] sm:%s371]
                  %483 = vst [vmem:[%s379 + $0xcc] sm:%s371] %v482
                  %v484 = vld [vmem:[%s378 + $0x1a0] sm:%s371]
                  %485 = vst [vmem:[%s379 + $0xd0] sm:%s371] %v484
                  %v486 = vld [vmem:[%s378 + $0x1a4] sm:%s371]
                  %487 = vst [vmem:[%s379 + $0xd4] sm:%s371] %v486
                  %v488 = vld [vmem:[%s378 + $0x1a8] sm:%s371]
                  %489 = vst [vmem:[%s379 + $0xd8] sm:%s371] %v488
                  %v490 = vld [vmem:[%s378 + $0x1ac] sm:%s371]
                  %491 = vst [vmem:[%s379 + $0xdc] sm:%s371] %v490
                  %v492 = vld [vmem:[%s378 + $0x1c0] sm:%s371]
                  %493 = vst [vmem:[%s379 + $0xe0] sm:%s371] %v492
                  %v494 = vld [vmem:[%s378 + $0x1c4] sm:%s371]
                  %495 = vst [vmem:[%s379 + $0xe4] sm:%s371] %v494
                  %v496 = vld [vmem:[%s378 + $0x1c8] sm:%s371]
                  %497 = vst [vmem:[%s379 + $0xe8] sm:%s371] %v496
                  %v498 = vld [vmem:[%s378 + $0x1cc] sm:%s371]
                  %499 = vst [vmem:[%s379 + $0xec] sm:%s371] %v498
                  %v500 = vld [vmem:[%s378 + $0x1e0] sm:%s371]
                  %501 = vst [vmem:[%s379 + $0xf0] sm:%s371] %v500
                  %v502 = vld [vmem:[%s378 + $0x1e4] sm:%s371]
                  %503 = vst [vmem:[%s379 + $0xf4] sm:%s371] %v502
                  %v504 = vld [vmem:[%s378 + $0x1e8] sm:%s371]
                  %505 = vst [vmem:[%s379 + $0xf8] sm:%s371] %v504
                  %v506 = vld [vmem:[%s378 + $0x1ec] sm:%s371]
                  %507 = vst [vmem:[%s379 + $0xfc] sm:%s371] %v506
                  %v508 = vld [vmem:[%s378 + $0x200] sm:%s371]
                  %509 = vst [vmem:[%s379 + $0x100] sm:%s371] %v508
                  %v510 = vld [vmem:[%s378 + $0x204] sm:%s371]
                  %511 = vst [vmem:[%s379 + $0x104] sm:%s371] %v510
                  %v512 = vld [vmem:[%s378 + $0x208] sm:%s371]
                  %513 = vst [vmem:[%s379 + $0x108] sm:%s371] %v512
                  %v514 = vld [vmem:[%s378 + $0x20c] sm:%s371]
                  %515 = vst [vmem:[%s379 + $0x10c] sm:%s371] %v514
                  %v516 = vld [vmem:[%s378 + $0x220] sm:%s371]
                  %517 = vst [vmem:[%s379 + $0x110] sm:%s371] %v516
                  %v518 = vld [vmem:[%s378 + $0x224] sm:%s371]
                  %519 = vst [vmem:[%s379 + $0x114] sm:%s371] %v518
                  %v520 = vld [vmem:[%s378 + $0x228] sm:%s371]
                  %521 = vst [vmem:[%s379 + $0x118] sm:%s371] %v520
                  %v522 = vld [vmem:[%s378 + $0x22c] sm:%s371]
                  %523 = vst [vmem:[%s379 + $0x11c] sm:%s371] %v522
                  %v524 = vld [vmem:[%s378 + $0x240] sm:%s371]
                  %525 = vst [vmem:[%s379 + $0x120] sm:%s371] %v524
                  %v526 = vld [vmem:[%s378 + $0x244] sm:%s371]
                  %527 = vst [vmem:[%s379 + $0x124] sm:%s371] %v526
                  %v528 = vld [vmem:[%s378 + $0x248] sm:%s371]
                  %529 = vst [vmem:[%s379 + $0x128] sm:%s371] %v528
                  %v530 = vld [vmem:[%s378 + $0x24c] sm:%s371]
                  %531 = vst [vmem:[%s379 + $0x12c] sm:%s371] %v530
                  %v532 = vld [vmem:[%s378 + $0x260] sm:%s371]
                  %533 = vst [vmem:[%s379 + $0x130] sm:%s371] %v532
                  %v534 = vld [vmem:[%s378 + $0x264] sm:%s371]
                  %535 = vst [vmem:[%s379 + $0x134] sm:%s371] %v534
                  %v536 = vld [vmem:[%s378 + $0x268] sm:%s371]
                  %537 = vst [vmem:[%s379 + $0x138] sm:%s371] %v536
                  %v538 = vld [vmem:[%s378 + $0x26c] sm:%s371]
                  %539 = vst [vmem:[%s379 + $0x13c] sm:%s371] %v538
                  %v540 = vld [vmem:[%s378 + $0x280] sm:%s371]
                  %541 = vst [vmem:[%s379 + $0x140] sm:%s371] %v540
                  %v542 = vld [vmem:[%s378 + $0x284] sm:%s371]
                  %543 = vst [vmem:[%s379 + $0x144] sm:%s371] %v542
                  %v544 = vld [vmem:[%s378 + $0x288] sm:%s371]
                  %545 = vst [vmem:[%s379 + $0x148] sm:%s371] %v544
                  %v546 = vld [vmem:[%s378 + $0x28c] sm:%s371]
                  %547 = vst [vmem:[%s379 + $0x14c] sm:%s371] %v546
                  %v548 = vld [vmem:[%s378 + $0x2a0] sm:%s371]
                  %549 = vst [vmem:[%s379 + $0x150] sm:%s371] %v548
                  %v550 = vld [vmem:[%s378 + $0x2a4] sm:%s371]
                  %551 = vst [vmem:[%s379 + $0x154] sm:%s371] %v550
                  %v552 = vld [vmem:[%s378 + $0x2a8] sm:%s371]
                  %553 = vst [vmem:[%s379 + $0x158] sm:%s371] %v552
                  %v554 = vld [vmem:[%s378 + $0x2ac] sm:%s371]
                  %555 = vst [vmem:[%s379 + $0x15c] sm:%s371] %v554
                  %v556 = vld [vmem:[%s378 + $0x2c0] sm:%s371]
                  %557 = vst [vmem:[%s379 + $0x160] sm:%s371] %v556
                  %v558 = vld [vmem:[%s378 + $0x2c4] sm:%s371]
                  %559 = vst [vmem:[%s379 + $0x164] sm:%s371] %v558
                  %v560 = vld [vmem:[%s378 + $0x2c8] sm:%s371]
                  %561 = vst [vmem:[%s379 + $0x168] sm:%s371] %v560
                  %v562 = vld [vmem:[%s378 + $0x2cc] sm:%s371]
                  %563 = vst [vmem:[%s379 + $0x16c] sm:%s371] %v562
                  %v564 = vld [vmem:[%s378 + $0x2e0] sm:%s371]
                  %565 = vst [vmem:[%s379 + $0x170] sm:%s371] %v564
                  %v566 = vld [vmem:[%s378 + $0x2e4] sm:%s371]
                  %567 = vst [vmem:[%s379 + $0x174] sm:%s371] %v566
                  %v568 = vld [vmem:[%s378 + $0x2e8] sm:%s371]
                  %569 = vst [vmem:[%s379 + $0x178] sm:%s371] %v568
                  %v570 = vld [vmem:[%s378 + $0x2ec] sm:%s371]
                  %571 = vst [vmem:[%s379 + $0x17c] sm:%s371] %v570
                  %v572 = vld [vmem:[%s378 + $0x300] sm:%s371]
                  %573 = vst [vmem:[%s379 + $0x180] sm:%s371] %v572
                  %v574 = vld [vmem:[%s378 + $0x304] sm:%s371]
                  %575 = vst [vmem:[%s379 + $0x184] sm:%s371] %v574
                  %v576 = vld [vmem:[%s378 + $0x308] sm:%s371]
                  %577 = vst [vmem:[%s379 + $0x188] sm:%s371] %v576
                  %v578 = vld [vmem:[%s378 + $0x30c] sm:%s371]
                  %579 = vst [vmem:[%s379 + $0x18c] sm:%s371] %v578
                  %v580 = vld [vmem:[%s378 + $0x320] sm:%s371]
                  %581 = vst [vmem:[%s379 + $0x190] sm:%s371] %v580
                  %v582 = vld [vmem:[%s378 + $0x324] sm:%s371]
                  %583 = vst [vmem:[%s379 + $0x194] sm:%s371] %v582
                  %v584 = vld [vmem:[%s378 + $0x328] sm:%s371]
                  %585 = vst [vmem:[%s379 + $0x198] sm:%s371] %v584
                  %v586 = vld [vmem:[%s378 + $0x32c] sm:%s371]
                  %587 = vst [vmem:[%s379 + $0x19c] sm:%s371] %v586
                  %v588 = vld [vmem:[%s378 + $0x340] sm:%s371]
                  %589 = vst [vmem:[%s379 + $0x1a0] sm:%s371] %v588
                  %v590 = vld [vmem:[%s378 + $0x344] sm:%s371]
                  %591 = vst [vmem:[%s379 + $0x1a4] sm:%s371] %v590
                  %v592 = vld [vmem:[%s378 + $0x348] sm:%s371]
                  %593 = vst [vmem:[%s379 + $0x1a8] sm:%s371] %v592
                  %v594 = vld [vmem:[%s378 + $0x34c] sm:%s371]
                  %595 = vst [vmem:[%s379 + $0x1ac] sm:%s371] %v594
                  %v596 = vld [vmem:[%s378 + $0x360] sm:%s371]
                  %597 = vst [vmem:[%s379 + $0x1b0] sm:%s371] %v596
                  %v598 = vld [vmem:[%s378 + $0x364] sm:%s371]
                  %599 = vst [vmem:[%s379 + $0x1b4] sm:%s371] %v598
                  %v600 = vld [vmem:[%s378 + $0x368] sm:%s371]
                  %601 = vst [vmem:[%s379 + $0x1b8] sm:%s371] %v600
                  %v602 = vld [vmem:[%s378 + $0x36c] sm:%s371]
                  %603 = vst [vmem:[%s379 + $0x1bc] sm:%s371] %v602
                  %v604 = vld [vmem:[%s378 + $0x380] sm:%s371]
                  %605 = vst [vmem:[%s379 + $0x1c0] sm:%s371] %v604
                  %v606 = vld [vmem:[%s378 + $0x384] sm:%s371]
                  %607 = vst [vmem:[%s379 + $0x1c4] sm:%s371] %v606
                  %v608 = vld [vmem:[%s378 + $0x388] sm:%s371]
                  %609 = vst [vmem:[%s379 + $0x1c8] sm:%s371] %v608
                  %v610 = vld [vmem:[%s378 + $0x38c] sm:%s371]
                  %611 = vst [vmem:[%s379 + $0x1cc] sm:%s371] %v610
                  %v612 = vld [vmem:[%s378 + $0x3a0] sm:%s371]
                  %613 = vst [vmem:[%s379 + $0x1d0] sm:%s371] %v612
                  %v614 = vld [vmem:[%s378 + $0x3a4] sm:%s371]
                  %615 = vst [vmem:[%s379 + $0x1d4] sm:%s371] %v614
                  %v616 = vld [vmem:[%s378 + $0x3a8] sm:%s371]
                  %617 = vst [vmem:[%s379 + $0x1d8] sm:%s371] %v616
                  %v618 = vld [vmem:[%s378 + $0x3ac] sm:%s371]
                  %619 = vst [vmem:[%s379 + $0x1dc] sm:%s371] %v618
                  %v620 = vld [vmem:[%s378 + $0x3c0] sm:%s371]
                  %621 = vst [vmem:[%s379 + $0x1e0] sm:%s371] %v620
                  %v622 = vld [vmem:[%s378 + $0x3c4] sm:%s371]
                  %623 = vst [vmem:[%s379 + $0x1e4] sm:%s371] %v622
                  %v624 = vld [vmem:[%s378 + $0x3c8] sm:%s371]
                  %625 = vst [vmem:[%s379 + $0x1e8] sm:%s371] %v624
                  %v626 = vld [vmem:[%s378 + $0x3cc] sm:%s371]
                  %627 = vst [vmem:[%s379 + $0x1ec] sm:%s371] %v626
                  %v628 = vld [vmem:[%s378 + $0x3e0] sm:%s371]
                  %629 = vst [vmem:[%s379 + $0x1f0] sm:%s371] %v628
                  %v630 = vld [vmem:[%s378 + $0x3e4] sm:%s371]
                  %631 = vst [vmem:[%s379 + $0x1f4] sm:%s371] %v630
                  %v632 = vld [vmem:[%s378 + $0x3e8] sm:%s371]
                  %633 = vst [vmem:[%s379 + $0x1f8] sm:%s371] %v632
                  %v634 = vld [vmem:[%s378 + $0x3ec] sm:%s371]
                  %635 = vst [vmem:[%s379 + $0x1fc] sm:%s371] %v634
                $region55: #{early_convolution.3} parent=42 // loop_footer
                  %s377 = sadd.s32 1, %s373
                $region56: #{early_convolution.3} parent=42 // loop_footer_branch
                  %372 = sbr.rel target = $region52
                $region57: #{early_convolution.3} parent=42 // loop_exit
                  _
              $region43: #{early_convolution.3} parent=27 // pred_fallthru
                _
            $region28: #{early_convolution.3} parent=23 // pred_fallthru
              _
            // Predicated region
            $region29: #{early_convolution.3} parent=23 // pred_check
              _
            $region30: #{early_convolution.3} parent=23 // pred_check_branch
              %93 = sbr.rel (0) target = $region32
            $region31: #{early_convolution.3} parent=23 // pred_region
              %s95 = ssub.s32 16, 1
              loop: start=0, step=1, limit=1
              $region33: #{early_convolution.3} parent=31 // loop_pre_header
                _
              $region34: #{early_convolution.3} parent=31 // loop_header
                %s97 = sphi 0, %s101
                %p98 = scmp.ge.s32.totalorder %s97, 1
                %s102 = sphi %s87, %s87
                %s103 = sphi %s84, %s84
              $region35: #{early_convolution.3} parent=31 // loop_header_branch
                %100 = sbr.rel (%p98) target = $region39
              $region36: #{early_convolution.3} parent=31 // loop_body
                %v104 = vld [vmem:[%s102] sm:%s95]
                %105 = vst [vmem:[%s103] sm:%s95] %v104
                %v106 = vld [vmem:[%s102 + $0x4] sm:%s95]
                %107 = vst [vmem:[%s103 + $0x4] sm:%s95] %v106
                %v108 = vld [vmem:[%s102 + $0x8] sm:%s95]
                %109 = vst [vmem:[%s103 + $0x8] sm:%s95] %v108
                %v110 = vld [vmem:[%s102 + $0xc] sm:%s95]
                %111 = vst [vmem:[%s103 + $0xc] sm:%s95] %v110
                %v112 = vld [vmem:[%s102 + $0x20] sm:%s95]
                %113 = vst [vmem:[%s103 + $0x10] sm:%s95] %v112
                %v114 = vld [vmem:[%s102 + $0x24] sm:%s95]
                %115 = vst [vmem:[%s103 + $0x14] sm:%s95] %v114
                %v116 = vld [vmem:[%s102 + $0x28] sm:%s95]
                %117 = vst [vmem:[%s103 + $0x18] sm:%s95] %v116
                %v118 = vld [vmem:[%s102 + $0x2c] sm:%s95]
                %119 = vst [vmem:[%s103 + $0x1c] sm:%s95] %v118
                %v120 = vld [vmem:[%s102 + $0x40] sm:%s95]
                %121 = vst [vmem:[%s103 + $0x20] sm:%s95] %v120
                %v122 = vld [vmem:[%s102 + $0x44] sm:%s95]
                %123 = vst [vmem:[%s103 + $0x24] sm:%s95] %v122
                %v124 = vld [vmem:[%s102 + $0x48] sm:%s95]
                %125 = vst [vmem:[%s103 + $0x28] sm:%s95] %v124
                %v126 = vld [vmem:[%s102 + $0x4c] sm:%s95]
                %127 = vst [vmem:[%s103 + $0x2c] sm:%s95] %v126
                %v128 = vld [vmem:[%s102 + $0x60] sm:%s95]
                %129 = vst [vmem:[%s103 + $0x30] sm:%s95] %v128
                %v130 = vld [vmem:[%s102 + $0x64] sm:%s95]
                %131 = vst [vmem:[%s103 + $0x34] sm:%s95] %v130
                %v132 = vld [vmem:[%s102 + $0x68] sm:%s95]
                %133 = vst [vmem:[%s103 + $0x38] sm:%s95] %v132
                %v134 = vld [vmem:[%s102 + $0x6c] sm:%s95]
                %135 = vst [vmem:[%s103 + $0x3c] sm:%s95] %v134
                %v136 = vld [vmem:[%s102 + $0x80] sm:%s95]
                %137 = vst [vmem:[%s103 + $0x40] sm:%s95] %v136
                %v138 = vld [vmem:[%s102 + $0x84] sm:%s95]
                %139 = vst [vmem:[%s103 + $0x44] sm:%s95] %v138
                %v140 = vld [vmem:[%s102 + $0x88] sm:%s95]
                %141 = vst [vmem:[%s103 + $0x48] sm:%s95] %v140
                %v142 = vld [vmem:[%s102 + $0x8c] sm:%s95]
                %143 = vst [vmem:[%s103 + $0x4c] sm:%s95] %v142
                %v144 = vld [vmem:[%s102 + $0xa0] sm:%s95]
                %145 = vst [vmem:[%s103 + $0x50] sm:%s95] %v144
                %v146 = vld [vmem:[%s102 + $0xa4] sm:%s95]
                %147 = vst [vmem:[%s103 + $0x54] sm:%s95] %v146
                %v148 = vld [vmem:[%s102 + $0xa8] sm:%s95]
                %149 = vst [vmem:[%s103 + $0x58] sm:%s95] %v148
                %v150 = vld [vmem:[%s102 + $0xac] sm:%s95]
                %151 = vst [vmem:[%s103 + $0x5c] sm:%s95] %v150
                %v152 = vld [vmem:[%s102 + $0xc0] sm:%s95]
                %153 = vst [vmem:[%s103 + $0x60] sm:%s95] %v152
                %v154 = vld [vmem:[%s102 + $0xc4] sm:%s95]
                %155 = vst [vmem:[%s103 + $0x64] sm:%s95] %v154
                %v156 = vld [vmem:[%s102 + $0xc8] sm:%s95]
                %157 = vst [vmem:[%s103 + $0x68] sm:%s95] %v156
                %v158 = vld [vmem:[%s102 + $0xcc] sm:%s95]
                %159 = vst [vmem:[%s103 + $0x6c] sm:%s95] %v158
                %v160 = vld [vmem:[%s102 + $0xe0] sm:%s95]
                %161 = vst [vmem:[%s103 + $0x70] sm:%s95] %v160
                %v162 = vld [vmem:[%s102 + $0xe4] sm:%s95]
                %163 = vst [vmem:[%s103 + $0x74] sm:%s95] %v162
                %v164 = vld [vmem:[%s102 + $0xe8] sm:%s95]
                %165 = vst [vmem:[%s103 + $0x78] sm:%s95] %v164
                %v166 = vld [vmem:[%s102 + $0xec] sm:%s95]
                %167 = vst [vmem:[%s103 + $0x7c] sm:%s95] %v166
                %v168 = vld [vmem:[%s102 + $0x100] sm:%s95]
                %169 = vst [vmem:[%s103 + $0x80] sm:%s95] %v168
                %v170 = vld [vmem:[%s102 + $0x104] sm:%s95]
                %171 = vst [vmem:[%s103 + $0x84] sm:%s95] %v170
                %v172 = vld [vmem:[%s102 + $0x108] sm:%s95]
                %173 = vst [vmem:[%s103 + $0x88] sm:%s95] %v172
                %v174 = vld [vmem:[%s102 + $0x10c] sm:%s95]
                %175 = vst [vmem:[%s103 + $0x8c] sm:%s95] %v174
                %v176 = vld [vmem:[%s102 + $0x120] sm:%s95]
                %177 = vst [vmem:[%s103 + $0x90] sm:%s95] %v176
                %v178 = vld [vmem:[%s102 + $0x124] sm:%s95]
                %179 = vst [vmem:[%s103 + $0x94] sm:%s95] %v178
                %v180 = vld [vmem:[%s102 + $0x128] sm:%s95]
                %181 = vst [vmem:[%s103 + $0x98] sm:%s95] %v180
                %v182 = vld [vmem:[%s102 + $0x12c] sm:%s95]
                %183 = vst [vmem:[%s103 + $0x9c] sm:%s95] %v182
                %v184 = vld [vmem:[%s102 + $0x140] sm:%s95]
                %185 = vst [vmem:[%s103 + $0xa0] sm:%s95] %v184
                %v186 = vld [vmem:[%s102 + $0x144] sm:%s95]
                %187 = vst [vmem:[%s103 + $0xa4] sm:%s95] %v186
                %v188 = vld [vmem:[%s102 + $0x148] sm:%s95]
                %189 = vst [vmem:[%s103 + $0xa8] sm:%s95] %v188
                %v190 = vld [vmem:[%s102 + $0x14c] sm:%s95]
                %191 = vst [vmem:[%s103 + $0xac] sm:%s95] %v190
                %v192 = vld [vmem:[%s102 + $0x160] sm:%s95]
                %193 = vst [vmem:[%s103 + $0xb0] sm:%s95] %v192
                %v194 = vld [vmem:[%s102 + $0x164] sm:%s95]
                %195 = vst [vmem:[%s103 + $0xb4] sm:%s95] %v194
                %v196 = vld [vmem:[%s102 + $0x168] sm:%s95]
                %197 = vst [vmem:[%s103 + $0xb8] sm:%s95] %v196
                %v198 = vld [vmem:[%s102 + $0x16c] sm:%s95]
                %199 = vst [vmem:[%s103 + $0xbc] sm:%s95] %v198
                %v200 = vld [vmem:[%s102 + $0x180] sm:%s95]
                %201 = vst [vmem:[%s103 + $0xc0] sm:%s95] %v200
                %v202 = vld [vmem:[%s102 + $0x184] sm:%s95]
                %203 = vst [vmem:[%s103 + $0xc4] sm:%s95] %v202
                %v204 = vld [vmem:[%s102 + $0x188] sm:%s95]
                %205 = vst [vmem:[%s103 + $0xc8] sm:%s95] %v204
                %v206 = vld [vmem:[%s102 + $0x18c] sm:%s95]
                %207 = vst [vmem:[%s103 + $0xcc] sm:%s95] %v206
                %v208 = vld [vmem:[%s102 + $0x1a0] sm:%s95]
                %209 = vst [vmem:[%s103 + $0xd0] sm:%s95] %v208
                %v210 = vld [vmem:[%s102 + $0x1a4] sm:%s95]
                %211 = vst [vmem:[%s103 + $0xd4] sm:%s95] %v210
                %v212 = vld [vmem:[%s102 + $0x1a8] sm:%s95]
                %213 = vst [vmem:[%s103 + $0xd8] sm:%s95] %v212
                %v214 = vld [vmem:[%s102 + $0x1ac] sm:%s95]
                %215 = vst [vmem:[%s103 + $0xdc] sm:%s95] %v214
                %v216 = vld [vmem:[%s102 + $0x1c0] sm:%s95]
                %217 = vst [vmem:[%s103 + $0xe0] sm:%s95] %v216
                %v218 = vld [vmem:[%s102 + $0x1c4] sm:%s95]
                %219 = vst [vmem:[%s103 + $0xe4] sm:%s95] %v218
                %v220 = vld [vmem:[%s102 + $0x1c8] sm:%s95]
                %221 = vst [vmem:[%s103 + $0xe8] sm:%s95] %v220
                %v222 = vld [vmem:[%s102 + $0x1cc] sm:%s95]
                %223 = vst [vmem:[%s103 + $0xec] sm:%s95] %v222
                %v224 = vld [vmem:[%s102 + $0x1e0] sm:%s95]
                %225 = vst [vmem:[%s103 + $0xf0] sm:%s95] %v224
                %v226 = vld [vmem:[%s102 + $0x1e4] sm:%s95]
                %227 = vst [vmem:[%s103 + $0xf4] sm:%s95] %v226
                %v228 = vld [vmem:[%s102 + $0x1e8] sm:%s95]
                %229 = vst [vmem:[%s103 + $0xf8] sm:%s95] %v228
                %v230 = vld [vmem:[%s102 + $0x1ec] sm:%s95]
                %231 = vst [vmem:[%s103 + $0xfc] sm:%s95] %v230
                %v232 = vld [vmem:[%s102 + $0x200] sm:%s95]
                %233 = vst [vmem:[%s103 + $0x100] sm:%s95] %v232
                %v234 = vld [vmem:[%s102 + $0x204] sm:%s95]
                %235 = vst [vmem:[%s103 + $0x104] sm:%s95] %v234
                %v236 = vld [vmem:[%s102 + $0x208] sm:%s95]
                %237 = vst [vmem:[%s103 + $0x108] sm:%s95] %v236
                %v238 = vld [vmem:[%s102 + $0x20c] sm:%s95]
                %239 = vst [vmem:[%s103 + $0x10c] sm:%s95] %v238
                %v240 = vld [vmem:[%s102 + $0x220] sm:%s95]
                %241 = vst [vmem:[%s103 + $0x110] sm:%s95] %v240
                %v242 = vld [vmem:[%s102 + $0x224] sm:%s95]
                %243 = vst [vmem:[%s103 + $0x114] sm:%s95] %v242
                %v244 = vld [vmem:[%s102 + $0x228] sm:%s95]
                %245 = vst [vmem:[%s103 + $0x118] sm:%s95] %v244
                %v246 = vld [vmem:[%s102 + $0x22c] sm:%s95]
                %247 = vst [vmem:[%s103 + $0x11c] sm:%s95] %v246
                %v248 = vld [vmem:[%s102 + $0x240] sm:%s95]
                %249 = vst [vmem:[%s103 + $0x120] sm:%s95] %v248
                %v250 = vld [vmem:[%s102 + $0x244] sm:%s95]
                %251 = vst [vmem:[%s103 + $0x124] sm:%s95] %v250
                %v252 = vld [vmem:[%s102 + $0x248] sm:%s95]
                %253 = vst [vmem:[%s103 + $0x128] sm:%s95] %v252
                %v254 = vld [vmem:[%s102 + $0x24c] sm:%s95]
                %255 = vst [vmem:[%s103 + $0x12c] sm:%s95] %v254
                %v256 = vld [vmem:[%s102 + $0x260] sm:%s95]
                %257 = vst [vmem:[%s103 + $0x130] sm:%s95] %v256
                %v258 = vld [vmem:[%s102 + $0x264] sm:%s95]
                %259 = vst [vmem:[%s103 + $0x134] sm:%s95] %v258
                %v260 = vld [vmem:[%s102 + $0x268] sm:%s95]
                %261 = vst [vmem:[%s103 + $0x138] sm:%s95] %v260
                %v262 = vld [vmem:[%s102 + $0x26c] sm:%s95]
                %263 = vst [vmem:[%s103 + $0x13c] sm:%s95] %v262
                %v264 = vld [vmem:[%s102 + $0x280] sm:%s95]
                %265 = vst [vmem:[%s103 + $0x140] sm:%s95] %v264
                %v266 = vld [vmem:[%s102 + $0x284] sm:%s95]
                %267 = vst [vmem:[%s103 + $0x144] sm:%s95] %v266
                %v268 = vld [vmem:[%s102 + $0x288] sm:%s95]
                %269 = vst [vmem:[%s103 + $0x148] sm:%s95] %v268
                %v270 = vld [vmem:[%s102 + $0x28c] sm:%s95]
                %271 = vst [vmem:[%s103 + $0x14c] sm:%s95] %v270
                %v272 = vld [vmem:[%s102 + $0x2a0] sm:%s95]
                %273 = vst [vmem:[%s103 + $0x150] sm:%s95] %v272
                %v274 = vld [vmem:[%s102 + $0x2a4] sm:%s95]
                %275 = vst [vmem:[%s103 + $0x154] sm:%s95] %v274
                %v276 = vld [vmem:[%s102 + $0x2a8] sm:%s95]
                %277 = vst [vmem:[%s103 + $0x158] sm:%s95] %v276
                %v278 = vld [vmem:[%s102 + $0x2ac] sm:%s95]
                %279 = vst [vmem:[%s103 + $0x15c] sm:%s95] %v278
                %v280 = vld [vmem:[%s102 + $0x2c0] sm:%s95]
                %281 = vst [vmem:[%s103 + $0x160] sm:%s95] %v280
                %v282 = vld [vmem:[%s102 + $0x2c4] sm:%s95]
                %283 = vst [vmem:[%s103 + $0x164] sm:%s95] %v282
                %v284 = vld [vmem:[%s102 + $0x2c8] sm:%s95]
                %285 = vst [vmem:[%s103 + $0x168] sm:%s95] %v284
                %v286 = vld [vmem:[%s102 + $0x2cc] sm:%s95]
                %287 = vst [vmem:[%s103 + $0x16c] sm:%s95] %v286
                %v288 = vld [vmem:[%s102 + $0x2e0] sm:%s95]
                %289 = vst [vmem:[%s103 + $0x170] sm:%s95] %v288
                %v290 = vld [vmem:[%s102 + $0x2e4] sm:%s95]
                %291 = vst [vmem:[%s103 + $0x174] sm:%s95] %v290
                %v292 = vld [vmem:[%s102 + $0x2e8] sm:%s95]
                %293 = vst [vmem:[%s103 + $0x178] sm:%s95] %v292
                %v294 = vld [vmem:[%s102 + $0x2ec] sm:%s95]
                %295 = vst [vmem:[%s103 + $0x17c] sm:%s95] %v294
                %v296 = vld [vmem:[%s102 + $0x300] sm:%s95]
                %297 = vst [vmem:[%s103 + $0x180] sm:%s95] %v296
                %v298 = vld [vmem:[%s102 + $0x304] sm:%s95]
                %299 = vst [vmem:[%s103 + $0x184] sm:%s95] %v298
                %v300 = vld [vmem:[%s102 + $0x308] sm:%s95]
                %301 = vst [vmem:[%s103 + $0x188] sm:%s95] %v300
                %v302 = vld [vmem:[%s102 + $0x30c] sm:%s95]
                %303 = vst [vmem:[%s103 + $0x18c] sm:%s95] %v302
                %v304 = vld [vmem:[%s102 + $0x320] sm:%s95]
                %305 = vst [vmem:[%s103 + $0x190] sm:%s95] %v304
                %v306 = vld [vmem:[%s102 + $0x324] sm:%s95]
                %307 = vst [vmem:[%s103 + $0x194] sm:%s95] %v306
                %v308 = vld [vmem:[%s102 + $0x328] sm:%s95]
                %309 = vst [vmem:[%s103 + $0x198] sm:%s95] %v308
                %v310 = vld [vmem:[%s102 + $0x32c] sm:%s95]
                %311 = vst [vmem:[%s103 + $0x19c] sm:%s95] %v310
                %v312 = vld [vmem:[%s102 + $0x340] sm:%s95]
                %313 = vst [vmem:[%s103 + $0x1a0] sm:%s95] %v312
                %v314 = vld [vmem:[%s102 + $0x344] sm:%s95]
                %315 = vst [vmem:[%s103 + $0x1a4] sm:%s95] %v314
                %v316 = vld [vmem:[%s102 + $0x348] sm:%s95]
                %317 = vst [vmem:[%s103 + $0x1a8] sm:%s95] %v316
                %v318 = vld [vmem:[%s102 + $0x34c] sm:%s95]
                %319 = vst [vmem:[%s103 + $0x1ac] sm:%s95] %v318
                %v320 = vld [vmem:[%s102 + $0x360] sm:%s95]
                %321 = vst [vmem:[%s103 + $0x1b0] sm:%s95] %v320
                %v322 = vld [vmem:[%s102 + $0x364] sm:%s95]
                %323 = vst [vmem:[%s103 + $0x1b4] sm:%s95] %v322
                %v324 = vld [vmem:[%s102 + $0x368] sm:%s95]
                %325 = vst [vmem:[%s103 + $0x1b8] sm:%s95] %v324
                %v326 = vld [vmem:[%s102 + $0x36c] sm:%s95]
                %327 = vst [vmem:[%s103 + $0x1bc] sm:%s95] %v326
                %v328 = vld [vmem:[%s102 + $0x380] sm:%s95]
                %329 = vst [vmem:[%s103 + $0x1c0] sm:%s95] %v328
                %v330 = vld [vmem:[%s102 + $0x384] sm:%s95]
                %331 = vst [vmem:[%s103 + $0x1c4] sm:%s95] %v330
                %v332 = vld [vmem:[%s102 + $0x388] sm:%s95]
                %333 = vst [vmem:[%s103 + $0x1c8] sm:%s95] %v332
                %v334 = vld [vmem:[%s102 + $0x38c] sm:%s95]
                %335 = vst [vmem:[%s103 + $0x1cc] sm:%s95] %v334
                %v336 = vld [vmem:[%s102 + $0x3a0] sm:%s95]
                %337 = vst [vmem:[%s103 + $0x1d0] sm:%s95] %v336
                %v338 = vld [vmem:[%s102 + $0x3a4] sm:%s95]
                %339 = vst [vmem:[%s103 + $0x1d4] sm:%s95] %v338
                %v340 = vld [vmem:[%s102 + $0x3a8] sm:%s95]
                %341 = vst [vmem:[%s103 + $0x1d8] sm:%s95] %v340
                %v342 = vld [vmem:[%s102 + $0x3ac] sm:%s95]
                %343 = vst [vmem:[%s103 + $0x1dc] sm:%s95] %v342
                %v344 = vld [vmem:[%s102 + $0x3c0] sm:%s95]
                %345 = vst [vmem:[%s103 + $0x1e0] sm:%s95] %v344
                %v346 = vld [vmem:[%s102 + $0x3c4] sm:%s95]
                %347 = vst [vmem:[%s103 + $0x1e4] sm:%s95] %v346
                %v348 = vld [vmem:[%s102 + $0x3c8] sm:%s95]
                %349 = vst [vmem:[%s103 + $0x1e8] sm:%s95] %v348
                %v350 = vld [vmem:[%s102 + $0x3cc] sm:%s95]
                %351 = vst [vmem:[%s103 + $0x1ec] sm:%s95] %v350
                %v352 = vld [vmem:[%s102 + $0x3e0] sm:%s95]
                %353 = vst [vmem:[%s103 + $0x1f0] sm:%s95] %v352
                %v354 = vld [vmem:[%s102 + $0x3e4] sm:%s95]
                %355 = vst [vmem:[%s103 + $0x1f4] sm:%s95] %v354
                %v356 = vld [vmem:[%s102 + $0x3e8] sm:%s95]
                %357 = vst [vmem:[%s103 + $0x1f8] sm:%s95] %v356
                %v358 = vld [vmem:[%s102 + $0x3ec] sm:%s95]
                %359 = vst [vmem:[%s103 + $0x1fc] sm:%s95] %v358
              $region37: #{early_convolution.3} parent=31 // loop_footer
                %s101 = sadd.s32 1, %s97
              $region38: #{early_convolution.3} parent=31 // loop_footer_branch
                %96 = sbr.rel target = $region34
              $region39: #{early_convolution.3} parent=31 // loop_exit
                _
            $region32: #{early_convolution.3} parent=23 // pred_fallthru
              _
          $region24: #{early_convolution.3} parent=19 // pred_fallthru
            _
          %636 = vnop
        $region20: #{early_convolution.3} parent=15 // pred_fallthru
          _
      $region16: #{early_convolution.3} parent=5 // pred_fallthru
        _
      %p637 = scmp.le.s32.totalorder 1, %s7
      %p638 = scmp.lt.s32.totalorder %s7, 3
      %p639 = pnand %p637, %p638
      %p640 = pneg %p639
      // Predicated region
      $region58: #{early_convolution.3} parent=5 // pred_check
        _
      $region59: #{early_convolution.3} parent=5 // pred_check_branch
        %642 = sbr.rel (%p639) target = $region61
      $region60: #{early_convolution.3} parent=5 // pred_region
        %s643 = ssub.s32 %s7, 1
        %s644 = sand.u32 %s20, 1
        %s645 = sand.u32 %s20, 1
        %s646 = smul.addr %s645, 512
        %s647 = scalar_lea.vmem [#allocation2], %s646
        // Predicated region
        $region62: #{early_convolution.3} parent=60 // pred_check
          %p648 = pneg %p33
        $region63: #{early_convolution.3} parent=60 // pred_check_branch
          %650 = sbr.rel (%p648) target = $region65
        $region64: #{early_convolution.3} parent=60 // pred_region
          _
        $region65: #{early_convolution.3} parent=60 // pred_fallthru
          _
        %s651 = sand.u32 %s20, 1
        %s652 = sand.u32 %s20, 1
        %s653 = smul.addr %s652, 512
        %s654 = scalar_lea.vmem [#allocation2], %s653
        %p655 = pneg %p33
        %p656 = pneg %p30
        %p657 = pneg %p59
        %p658 = pneg %p56
        %p659 = scmp.lt.s32.totalorder %s12, 1
        %s660 = scalar_select %p659, %s12, 1
        %s661 = smul.addr %s660, 32
        %s662 = smul.addr %s661, 4
        %s663 = scalar_lea.vmem %s1, %s662
        %p664 = scmp.lt.s32.totalorder %s12, 1
        %s665 = scalar_select %p664, %s12, 1
        %s666 = smul.addr %s665, 32
        %s667 = smul.addr %s666, 4
        %s668 = scalar_lea.vmem %s1, %s667
        %v669 = vld [vmem:[%s647] sm:$0xf]
        %v670 = vld [vmem:[%s647 + $0x4] sm:$0xf]
        %v671 = vld [vmem:[%s647 + $0x8] sm:$0xf]
        %v672 = vld [vmem:[%s647 + $0xc] sm:$0xf]
        %v673 = vld [vmem:[%s647 + $0x10] sm:$0xf]
        %v674 = vld [vmem:[%s647 + $0x14] sm:$0xf]
        %v675 = vld [vmem:[%s647 + $0x18] sm:$0xf]
        %v676 = vld [vmem:[%s647 + $0x1c] sm:$0xf]
        %v677 = vld [vmem:[%s647 + $0x20] sm:$0xf]
        %v678 = vld [vmem:[%s647 + $0x24] sm:$0xf]
        %v679 = vld [vmem:[%s647 + $0x28] sm:$0xf]
        %v680 = vld [vmem:[%s647 + $0x2c] sm:$0xf]
        %v681 = vld [vmem:[%s647 + $0x30] sm:$0xf]
        %v682 = vld [vmem:[%s647 + $0x34] sm:$0xf]
        %v683 = vld [vmem:[%s647 + $0x38] sm:$0xf]
        %v684 = vld [vmem:[%s647 + $0x3c] sm:$0xf]
        %v685 = vld [vmem:[%s647 + $0x40] sm:$0xf]
        %v686 = vld [vmem:[%s647 + $0x44] sm:$0xf]
        %v687 = vld [vmem:[%s647 + $0x48] sm:$0xf]
        %v688 = vld [vmem:[%s647 + $0x4c] sm:$0xf]
        %v689 = vld [vmem:[%s647 + $0x50] sm:$0xf]
        %v690 = vld [vmem:[%s647 + $0x54] sm:$0xf]
        %v691 = vld [vmem:[%s647 + $0x58] sm:$0xf]
        %v692 = vld [vmem:[%s647 + $0x5c] sm:$0xf]
        %v693 = vld [vmem:[%s647 + $0x60] sm:$0xf]
        %v694 = vld [vmem:[%s647 + $0x64] sm:$0xf]
        %v695 = vld [vmem:[%s647 + $0x68] sm:$0xf]
        %v696 = vld [vmem:[%s647 + $0x6c] sm:$0xf]
        %v697 = vld [vmem:[%s647 + $0x70] sm:$0xf]
        %v698 = vld [vmem:[%s647 + $0x74] sm:$0xf]
        %v699 = vld [vmem:[%s647 + $0x78] sm:$0xf]
        %v700 = vld [vmem:[%s647 + $0x7c] sm:$0xf]
        %v701 = vld [vmem:[%s647 + $0x80] sm:$0xf]
        %v702 = vld [vmem:[%s647 + $0x84] sm:$0xf]
        %v703 = vld [vmem:[%s647 + $0x88] sm:$0xf]
        %v704 = vld [vmem:[%s647 + $0x8c] sm:$0xf]
        %v705 = vld [vmem:[%s647 + $0x90] sm:$0xf]
        %v706 = vld [vmem:[%s647 + $0x94] sm:$0xf]
        %v707 = vld [vmem:[%s647 + $0x98] sm:$0xf]
        %v708 = vld [vmem:[%s647 + $0x9c] sm:$0xf]
        %v709 = vld [vmem:[%s647 + $0xa0] sm:$0xf]
        %v710 = vld [vmem:[%s647 + $0xa4] sm:$0xf]
        %v711 = vld [vmem:[%s647 + $0xa8] sm:$0xf]
        %v712 = vld [vmem:[%s647 + $0xac] sm:$0xf]
        %v713 = vld [vmem:[%s647 + $0xb0] sm:$0xf]
        %v714 = vld [vmem:[%s647 + $0xb4] sm:$0xf]
        %v715 = vld [vmem:[%s647 + $0xb8] sm:$0xf]
        %v716 = vld [vmem:[%s647 + $0xbc] sm:$0xf]
        %v717 = vld [vmem:[%s647 + $0xc0] sm:$0xf]
        %v718 = vld [vmem:[%s647 + $0xc4] sm:$0xf]
        %v719 = vld [vmem:[%s647 + $0xc8] sm:$0xf]
        %v720 = vld [vmem:[%s647 + $0xcc] sm:$0xf]
        %v721 = vld [vmem:[%s647 + $0xd0] sm:$0xf]
        %v722 = vld [vmem:[%s647 + $0xd4] sm:$0xf]
        %v723 = vld [vmem:[%s647 + $0xd8] sm:$0xf]
        %v724 = vld [vmem:[%s647 + $0xdc] sm:$0xf]
        %v725 = vld [vmem:[%s647 + $0xe0] sm:$0xf]
        %v726 = vld [vmem:[%s647 + $0xe4] sm:$0xf]
        %v727 = vld [vmem:[%s647 + $0xe8] sm:$0xf]
        %v728 = vld [vmem:[%s647 + $0xec] sm:$0xf]
        %v729 = vld [vmem:[%s647 + $0xf0] sm:$0xf]
        %v730 = vld [vmem:[%s647 + $0xf4] sm:$0xf]
        %v731 = vld [vmem:[%s647 + $0xf8] sm:$0xf]
        %v732 = vld [vmem:[%s647 + $0xfc] sm:$0xf]
        %v733 = vld [vmem:[%s647 + $0x100] sm:$0xf]
        %v734 = vld [vmem:[%s647 + $0x104] sm:$0xf]
        %v735 = vld [vmem:[%s647 + $0x108] sm:$0xf]
        %v736 = vld [vmem:[%s647 + $0x10c] sm:$0xf]
        %v737 = vld [vmem:[%s647 + $0x110] sm:$0xf]
        %v738 = vld [vmem:[%s647 + $0x114] sm:$0xf]
        %v739 = vld [vmem:[%s647 + $0x118] sm:$0xf]
        %v740 = vld [vmem:[%s647 + $0x11c] sm:$0xf]
        %v741 = vld [vmem:[%s647 + $0x120] sm:$0xf]
        %v742 = vld [vmem:[%s647 + $0x124] sm:$0xf]
        %v743 = vld [vmem:[%s647 + $0x128] sm:$0xf]
        %v744 = vld [vmem:[%s647 + $0x12c] sm:$0xf]
        %v745 = vld [vmem:[%s647 + $0x130] sm:$0xf]
        %v746 = vld [vmem:[%s647 + $0x134] sm:$0xf]
        %v747 = vld [vmem:[%s647 + $0x138] sm:$0xf]
        %v748 = vld [vmem:[%s647 + $0x13c] sm:$0xf]
        %v749 = vld [vmem:[%s647 + $0x140] sm:$0xf]
        %v750 = vld [vmem:[%s647 + $0x144] sm:$0xf]
        %v751 = vld [vmem:[%s647 + $0x148] sm:$0xf]
        %v752 = vld [vmem:[%s647 + $0x14c] sm:$0xf]
        %v753 = vld [vmem:[%s647 + $0x150] sm:$0xf]
        %v754 = vld [vmem:[%s647 + $0x154] sm:$0xf]
        %v755 = vld [vmem:[%s647 + $0x158] sm:$0xf]
        %v756 = vld [vmem:[%s647 + $0x15c] sm:$0xf]
        %v757 = vld [vmem:[%s647 + $0x160] sm:$0xf]
        %v758 = vld [vmem:[%s647 + $0x164] sm:$0xf]
        %v759 = vld [vmem:[%s647 + $0x168] sm:$0xf]
        %v760 = vld [vmem:[%s647 + $0x16c] sm:$0xf]
        %v761 = vld [vmem:[%s647 + $0x170] sm:$0xf]
        %v762 = vld [vmem:[%s647 + $0x174] sm:$0xf]
        %v763 = vld [vmem:[%s647 + $0x178] sm:$0xf]
        %v764 = vld [vmem:[%s647 + $0x17c] sm:$0xf]
        %v765 = vld [vmem:[%s647 + $0x180] sm:$0xf]
        %v766 = vld [vmem:[%s647 + $0x184] sm:$0xf]
        %v767 = vld [vmem:[%s647 + $0x188] sm:$0xf]
        %v768 = vld [vmem:[%s647 + $0x18c] sm:$0xf]
        %v769 = vld [vmem:[%s647 + $0x190] sm:$0xf]
        %v770 = vld [vmem:[%s647 + $0x194] sm:$0xf]
        %v771 = vld [vmem:[%s647 + $0x198] sm:$0xf]
        %v772 = vld [vmem:[%s647 + $0x19c] sm:$0xf]
        %v773 = vld [vmem:[%s647 + $0x1a0] sm:$0xf]
        %v774 = vld [vmem:[%s647 + $0x1a4] sm:$0xf]
        %v775 = vld [vmem:[%s647 + $0x1a8] sm:$0xf]
        %v776 = vld [vmem:[%s647 + $0x1ac] sm:$0xf]
        %v777 = vld [vmem:[%s647 + $0x1b0] sm:$0xf]
        %v778 = vld [vmem:[%s647 + $0x1b4] sm:$0xf]
        %v779 = vld [vmem:[%s647 + $0x1b8] sm:$0xf]
        %v780 = vld [vmem:[%s647 + $0x1bc] sm:$0xf]
        %v781 = vld [vmem:[%s647 + $0x1c0] sm:$0xf]
        %v782 = vld [vmem:[%s647 + $0x1c4] sm:$0xf]
        %v783 = vld [vmem:[%s647 + $0x1c8] sm:$0xf]
        %v784 = vld [vmem:[%s647 + $0x1cc] sm:$0xf]
        %v785 = vld [vmem:[%s647 + $0x1d0] sm:$0xf]
        %v786 = vld [vmem:[%s647 + $0x1d4] sm:$0xf]
        %v787 = vld [vmem:[%s647 + $0x1d8] sm:$0xf]
        %v788 = vld [vmem:[%s647 + $0x1dc] sm:$0xf]
        %v789 = vld [vmem:[%s647 + $0x1e0] sm:$0xf]
        %v790 = vld [vmem:[%s647 + $0x1e4] sm:$0xf]
        %v791 = vld [vmem:[%s647 + $0x1e8] sm:$0xf]
        %v792 = vld [vmem:[%s647 + $0x1ec] sm:$0xf]
        %v793 = vld [vmem:[%s647 + $0x1f0] sm:$0xf]
        %v794 = vld [vmem:[%s647 + $0x1f4] sm:$0xf]
        %v795 = vld [vmem:[%s647 + $0x1f8] sm:$0xf]
        %v796 = vld [vmem:[%s647 + $0x1fc] sm:$0xf]
        %v829 = vrot.slane %v671, 7
        %v830 = vrot.slane %v675, 7
        %v831 = vrot.slane %v679, 7
        %v832 = vrot.slane %v683, 7
        %v833 = vrot.slane %v687, 7
        %v834 = vrot.slane %v691, 7
        %v835 = vrot.slane %v695, 7
        %v836 = vrot.slane %v699, 7
        %v837 = vrot.slane %v703, 7
        %v838 = vrot.slane %v707, 7
        %v839 = vrot.slane %v711, 7
        %v840 = vrot.slane %v715, 7
        %v841 = vrot.slane %v719, 7
        %v842 = vrot.slane %v723, 7
        %v843 = vrot.slane %v727, 7
        %v844 = vrot.slane %v731, 7
        %v845 = vrot.slane %v735, 7
        %v846 = vrot.slane %v739, 7
        %v847 = vrot.slane %v743, 7
        %v848 = vrot.slane %v747, 7
        %v849 = vrot.slane %v751, 7
        %v850 = vrot.slane %v755, 7
        %v851 = vrot.slane %v759, 7
        %v852 = vrot.slane %v763, 7
        %v853 = vrot.slane %v767, 7
        %v854 = vrot.slane %v771, 7
        %v855 = vrot.slane %v775, 7
        %v856 = vrot.slane %v779, 7
        %v857 = vrot.slane %v783, 7
        %v858 = vrot.slane %v787, 7
        %v859 = vrot.slane %v791, 7
        %v860 = vrot.slane %v795, 7
        %vm893 = vcmask 1040384
        %v894 = vsel %vm893, 0.0, %v829
        %v895 = vsel %vm893, 0.0, %v830
        %v896 = vsel %vm893, 0.0, %v831
        %v897 = vsel %vm893, 0.0, %v832
        %v898 = vsel %vm893, 0.0, %v833
        %v899 = vsel %vm893, 0.0, %v834
        %v900 = vsel %vm893, 0.0, %v835
        %v901 = vsel %vm893, 0.0, %v836
        %v902 = vsel %vm893, 0.0, %v837
        %v903 = vsel %vm893, 0.0, %v838
        %v904 = vsel %vm893, 0.0, %v839
        %v905 = vsel %vm893, 0.0, %v840
        %v906 = vsel %vm893, 0.0, %v841
        %v907 = vsel %vm893, 0.0, %v842
        %v908 = vsel %vm893, 0.0, %v843
        %v909 = vsel %vm893, 0.0, %v844
        %v910 = vsel %vm893, 0.0, %v845
        %v911 = vsel %vm893, 0.0, %v846
        %v912 = vsel %vm893, 0.0, %v847
        %v913 = vsel %vm893, 0.0, %v848
        %v914 = vsel %vm893, 0.0, %v849
        %v915 = vsel %vm893, 0.0, %v850
        %v916 = vsel %vm893, 0.0, %v851
        %v917 = vsel %vm893, 0.0, %v852
        %v918 = vsel %vm893, 0.0, %v853
        %v919 = vsel %vm893, 0.0, %v854
        %v920 = vsel %vm893, 0.0, %v855
        %v921 = vsel %vm893, 0.0, %v856
        %v922 = vsel %vm893, 0.0, %v857
        %v923 = vsel %vm893, 0.0, %v858
        %v924 = vsel %vm893, 0.0, %v859
        %v925 = vsel %vm893, 0.0, %v860
        %v958 = vrot.slane %v672, 7
        %v959 = vrot.slane %v676, 7
        %v960 = vrot.slane %v680, 7
        %v961 = vrot.slane %v684, 7
        %v962 = vrot.slane %v688, 7
        %v963 = vrot.slane %v692, 7
        %v964 = vrot.slane %v696, 7
        %v965 = vrot.slane %v700, 7
        %v966 = vrot.slane %v704, 7
        %v967 = vrot.slane %v708, 7
        %v968 = vrot.slane %v712, 7
        %v969 = vrot.slane %v716, 7
        %v970 = vrot.slane %v720, 7
        %v971 = vrot.slane %v724, 7
        %v972 = vrot.slane %v728, 7
        %v973 = vrot.slane %v732, 7
        %v974 = vrot.slane %v736, 7
        %v975 = vrot.slane %v740, 7
        %v976 = vrot.slane %v744, 7
        %v977 = vrot.slane %v748, 7
        %v978 = vrot.slane %v752, 7
        %v979 = vrot.slane %v756, 7
        %v980 = vrot.slane %v760, 7
        %v981 = vrot.slane %v764, 7
        %v982 = vrot.slane %v768, 7
        %v983 = vrot.slane %v772, 7
        %v984 = vrot.slane %v776, 7
        %v985 = vrot.slane %v780, 7
        %v986 = vrot.slane %v784, 7
        %v987 = vrot.slane %v788, 7
        %v988 = vrot.slane %v792, 7
        %v989 = vrot.slane %v796, 7
        %v1022 = vsel %vm893, 0.0, %v958
        %v1023 = vsel %vm893, 0.0, %v959
        %v1024 = vsel %vm893, 0.0, %v960
        %v1025 = vsel %vm893, 0.0, %v961
        %v1026 = vsel %vm893, 0.0, %v962
        %v1027 = vsel %vm893, 0.0, %v963
        %v1028 = vsel %vm893, 0.0, %v964
        %v1029 = vsel %vm893, 0.0, %v965
        %v1030 = vsel %vm893, 0.0, %v966
        %v1031 = vsel %vm893, 0.0, %v967
        %v1032 = vsel %vm893, 0.0, %v968
        %v1033 = vsel %vm893, 0.0, %v969
        %v1034 = vsel %vm893, 0.0, %v970
        %v1035 = vsel %vm893, 0.0, %v971
        %v1036 = vsel %vm893, 0.0, %v972
        %v1037 = vsel %vm893, 0.0, %v973
        %v1038 = vsel %vm893, 0.0, %v974
        %v1039 = vsel %vm893, 0.0, %v975
        %v1040 = vsel %vm893, 0.0, %v976
        %v1041 = vsel %vm893, 0.0, %v977
        %v1042 = vsel %vm893, 0.0, %v978
        %v1043 = vsel %vm893, 0.0, %v979
        %v1044 = vsel %vm893, 0.0, %v980
        %v1045 = vsel %vm893, 0.0, %v981
        %v1046 = vsel %vm893, 0.0, %v982
        %v1047 = vsel %vm893, 0.0, %v983
        %v1048 = vsel %vm893, 0.0, %v984
        %v1049 = vsel %vm893, 0.0, %v985
        %v1050 = vsel %vm893, 0.0, %v986
        %v1051 = vsel %vm893, 0.0, %v987
        %v1052 = vsel %vm893, 0.0, %v988
        %v1053 = vsel %vm893, 0.0, %v989
        %1086 = vrot.lane.b32.xlu0 %v670, 1
        %v1087 = vpop.permute.xlu0 %1086
        %1088 = vrot.lane.b32.xlu0 %v674, 1
        %v1089 = vpop.permute.xlu0 %1088
        %1090 = vrot.lane.b32.xlu0 %v678, 1
        %v1091 = vpop.permute.xlu0 %1090
        %1092 = vrot.lane.b32.xlu0 %v682, 1
        %v1093 = vpop.permute.xlu0 %1092
        %1094 = vrot.lane.b32.xlu0 %v686, 1
        %v1095 = vpop.permute.xlu0 %1094
        %1096 = vrot.lane.b32.xlu0 %v690, 1
        %v1097 = vpop.permute.xlu0 %1096
        %1098 = vrot.lane.b32.xlu0 %v694, 1
        %v1099 = vpop.permute.xlu0 %1098
        %1100 = vrot.lane.b32.xlu0 %v698, 1
        %v1101 = vpop.permute.xlu0 %1100
        %1102 = vrot.lane.b32.xlu0 %v702, 1
        %v1103 = vpop.permute.xlu0 %1102
        %1104 = vrot.lane.b32.xlu0 %v706, 1
        %v1105 = vpop.permute.xlu0 %1104
        %1106 = vrot.lane.b32.xlu0 %v710, 1
        %v1107 = vpop.permute.xlu0 %1106
        %1108 = vrot.lane.b32.xlu0 %v714, 1
        %v1109 = vpop.permute.xlu0 %1108
        %1110 = vrot.lane.b32.xlu0 %v718, 1
        %v1111 = vpop.permute.xlu0 %1110
        %1112 = vrot.lane.b32.xlu0 %v722, 1
        %v1113 = vpop.permute.xlu0 %1112
        %1114 = vrot.lane.b32.xlu0 %v726, 1
        %v1115 = vpop.permute.xlu0 %1114
        %1116 = vrot.lane.b32.xlu0 %v730, 1
        %v1117 = vpop.permute.xlu0 %1116
        %1118 = vrot.lane.b32.xlu0 %v734, 1
        %v1119 = vpop.permute.xlu0 %1118
        %1120 = vrot.lane.b32.xlu0 %v738, 1
        %v1121 = vpop.permute.xlu0 %1120
        %1122 = vrot.lane.b32.xlu0 %v742, 1
        %v1123 = vpop.permute.xlu0 %1122
        %1124 = vrot.lane.b32.xlu0 %v746, 1
        %v1125 = vpop.permute.xlu0 %1124
        %1126 = vrot.lane.b32.xlu0 %v750, 1
        %v1127 = vpop.permute.xlu0 %1126
        %1128 = vrot.lane.b32.xlu0 %v754, 1
        %v1129 = vpop.permute.xlu0 %1128
        %1130 = vrot.lane.b32.xlu0 %v758, 1
        %v1131 = vpop.permute.xlu0 %1130
        %1132 = vrot.lane.b32.xlu0 %v762, 1
        %v1133 = vpop.permute.xlu0 %1132
        %1134 = vrot.lane.b32.xlu0 %v766, 1
        %v1135 = vpop.permute.xlu0 %1134
        %1136 = vrot.lane.b32.xlu0 %v770, 1
        %v1137 = vpop.permute.xlu0 %1136
        %1138 = vrot.lane.b32.xlu0 %v774, 1
        %v1139 = vpop.permute.xlu0 %1138
        %1140 = vrot.lane.b32.xlu0 %v778, 1
        %v1141 = vpop.permute.xlu0 %1140
        %1142 = vrot.lane.b32.xlu0 %v782, 1
        %v1143 = vpop.permute.xlu0 %1142
        %1144 = vrot.lane.b32.xlu0 %v786, 1
        %v1145 = vpop.permute.xlu0 %1144
        %1146 = vrot.lane.b32.xlu0 %v790, 1
        %v1147 = vpop.permute.xlu0 %1146
        %1148 = vrot.lane.b32.xlu0 %v794, 1
        %v1149 = vpop.permute.xlu0 %1148
        %vm1182 = vcmask 7168
        %v1183 = vsel %vm1182, 0.0, %v1087
        %v1184 = vsel %vm1182, 0.0, %v1089
        %v1185 = vsel %vm1182, 0.0, %v1091
        %v1186 = vsel %vm1182, 0.0, %v1093
        %v1187 = vsel %vm1182, 0.0, %v1095
        %v1188 = vsel %vm1182, 0.0, %v1097
        %v1189 = vsel %vm1182, 0.0, %v1099
        %v1190 = vsel %vm1182, 0.0, %v1101
        %v1191 = vsel %vm1182, 0.0, %v1103
        %v1192 = vsel %vm1182, 0.0, %v1105
        %v1193 = vsel %vm1182, 0.0, %v1107
        %v1194 = vsel %vm1182, 0.0, %v1109
        %v1195 = vsel %vm1182, 0.0, %v1111
        %v1196 = vsel %vm1182, 0.0, %v1113
        %v1197 = vsel %vm1182, 0.0, %v1115
        %v1198 = vsel %vm1182, 0.0, %v1117
        %v1199 = vsel %vm1182, 0.0, %v1119
        %v1200 = vsel %vm1182, 0.0, %v1121
        %v1201 = vsel %vm1182, 0.0, %v1123
        %v1202 = vsel %vm1182, 0.0, %v1125
        %v1203 = vsel %vm1182, 0.0, %v1127
        %v1204 = vsel %vm1182, 0.0, %v1129
        %v1205 = vsel %vm1182, 0.0, %v1131
        %v1206 = vsel %vm1182, 0.0, %v1133
        %v1207 = vsel %vm1182, 0.0, %v1135
        %v1208 = vsel %vm1182, 0.0, %v1137
        %v1209 = vsel %vm1182, 0.0, %v1139
        %v1210 = vsel %vm1182, 0.0, %v1141
        %v1211 = vsel %vm1182, 0.0, %v1143
        %v1212 = vsel %vm1182, 0.0, %v1145
        %v1213 = vsel %vm1182, 0.0, %v1147
        %v1214 = vsel %vm1182, 0.0, %v1149
        %1215 = vrot.lane.b32.xlu0 %v672, 1
        %v1216 = vpop.permute.xlu0 %1215
        %1217 = vrot.lane.b32.xlu0 %v676, 1
        %v1218 = vpop.permute.xlu0 %1217
        %1219 = vrot.lane.b32.xlu0 %v680, 1
        %v1220 = vpop.permute.xlu0 %1219
        %1221 = vrot.lane.b32.xlu0 %v684, 1
        %v1222 = vpop.permute.xlu0 %1221
        %1223 = vrot.lane.b32.xlu0 %v688, 1
        %v1224 = vpop.permute.xlu0 %1223
        %1225 = vrot.lane.b32.xlu0 %v692, 1
        %v1226 = vpop.permute.xlu0 %1225
        %1227 = vrot.lane.b32.xlu0 %v696, 1
        %v1228 = vpop.permute.xlu0 %1227
        %1229 = vrot.lane.b32.xlu0 %v700, 1
        %v1230 = vpop.permute.xlu0 %1229
        %1231 = vrot.lane.b32.xlu0 %v704, 1
        %v1232 = vpop.permute.xlu0 %1231
        %1233 = vrot.lane.b32.xlu0 %v708, 1
        %v1234 = vpop.permute.xlu0 %1233
        %1235 = vrot.lane.b32.xlu0 %v712, 1
        %v1236 = vpop.permute.xlu0 %1235
        %1237 = vrot.lane.b32.xlu0 %v716, 1
        %v1238 = vpop.permute.xlu0 %1237
        %1239 = vrot.lane.b32.xlu0 %v720, 1
        %v1240 = vpop.permute.xlu0 %1239
        %1241 = vrot.lane.b32.xlu0 %v724, 1
        %v1242 = vpop.permute.xlu0 %1241
        %1243 = vrot.lane.b32.xlu0 %v728, 1
        %v1244 = vpop.permute.xlu0 %1243
        %1245 = vrot.lane.b32.xlu0 %v732, 1
        %v1246 = vpop.permute.xlu0 %1245
        %1247 = vrot.lane.b32.xlu0 %v736, 1
        %v1248 = vpop.permute.xlu0 %1247
        %1249 = vrot.lane.b32.xlu0 %v740, 1
        %v1250 = vpop.permute.xlu0 %1249
        %1251 = vrot.lane.b32.xlu0 %v744, 1
        %v1252 = vpop.permute.xlu0 %1251
        %1253 = vrot.lane.b32.xlu0 %v748, 1
        %v1254 = vpop.permute.xlu0 %1253
        %1255 = vrot.lane.b32.xlu0 %v752, 1
        %v1256 = vpop.permute.xlu0 %1255
        %1257 = vrot.lane.b32.xlu0 %v756, 1
        %v1258 = vpop.permute.xlu0 %1257
        %1259 = vrot.lane.b32.xlu0 %v760, 1
        %v1260 = vpop.permute.xlu0 %1259
        %1261 = vrot.lane.b32.xlu0 %v764, 1
        %v1262 = vpop.permute.xlu0 %1261
        %1263 = vrot.lane.b32.xlu0 %v768, 1
        %v1264 = vpop.permute.xlu0 %1263
        %1265 = vrot.lane.b32.xlu0 %v772, 1
        %v1266 = vpop.permute.xlu0 %1265
        %1267 = vrot.lane.b32.xlu0 %v776, 1
        %v1268 = vpop.permute.xlu0 %1267
        %1269 = vrot.lane.b32.xlu0 %v780, 1
        %v1270 = vpop.permute.xlu0 %1269
        %1271 = vrot.lane.b32.xlu0 %v784, 1
        %v1272 = vpop.permute.xlu0 %1271
        %1273 = vrot.lane.b32.xlu0 %v788, 1
        %v1274 = vpop.permute.xlu0 %1273
        %1275 = vrot.lane.b32.xlu0 %v792, 1
        %v1276 = vpop.permute.xlu0 %1275
        %1277 = vrot.lane.b32.xlu0 %v796, 1
        %v1278 = vpop.permute.xlu0 %1277
        %v1311 = vsel %vm1182, 0.0, %v1216
        %v1312 = vsel %vm1182, 0.0, %v1218
        %v1313 = vsel %vm1182, 0.0, %v1220
        %v1314 = vsel %vm1182, 0.0, %v1222
        %v1315 = vsel %vm1182, 0.0, %v1224
        %v1316 = vsel %vm1182, 0.0, %v1226
        %v1317 = vsel %vm1182, 0.0, %v1228
        %v1318 = vsel %vm1182, 0.0, %v1230
        %v1319 = vsel %vm1182, 0.0, %v1232
        %v1320 = vsel %vm1182, 0.0, %v1234
        %v1321 = vsel %vm1182, 0.0, %v1236
        %v1322 = vsel %vm1182, 0.0, %v1238
        %v1323 = vsel %vm1182, 0.0, %v1240
        %v1324 = vsel %vm1182, 0.0, %v1242
        %v1325 = vsel %vm1182, 0.0, %v1244
        %v1326 = vsel %vm1182, 0.0, %v1246
        %v1327 = vsel %vm1182, 0.0, %v1248
        %v1328 = vsel %vm1182, 0.0, %v1250
        %v1329 = vsel %vm1182, 0.0, %v1252
        %v1330 = vsel %vm1182, 0.0, %v1254
        %v1331 = vsel %vm1182, 0.0, %v1256
        %v1332 = vsel %vm1182, 0.0, %v1258
        %v1333 = vsel %vm1182, 0.0, %v1260
        %v1334 = vsel %vm1182, 0.0, %v1262
        %v1335 = vsel %vm1182, 0.0, %v1264
        %v1336 = vsel %vm1182, 0.0, %v1266
        %v1337 = vsel %vm1182, 0.0, %v1268
        %v1338 = vsel %vm1182, 0.0, %v1270
        %v1339 = vsel %vm1182, 0.0, %v1272
        %v1340 = vsel %vm1182, 0.0, %v1274
        %v1341 = vsel %vm1182, 0.0, %v1276
        %v1342 = vsel %vm1182, 0.0, %v1278
        %1375 = vrot.lane.b32.xlu0 %v1022, 1
        %v1376 = vpop.permute.xlu0 %1375
        %1377 = vrot.lane.b32.xlu0 %v1023, 1
        %v1378 = vpop.permute.xlu0 %1377
        %1379 = vrot.lane.b32.xlu0 %v1024, 1
        %v1380 = vpop.permute.xlu0 %1379
        %1381 = vrot.lane.b32.xlu0 %v1025, 1
        %v1382 = vpop.permute.xlu0 %1381
        %1383 = vrot.lane.b32.xlu0 %v1026, 1
        %v1384 = vpop.permute.xlu0 %1383
        %1385 = vrot.lane.b32.xlu0 %v1027, 1
        %v1386 = vpop.permute.xlu0 %1385
        %1387 = vrot.lane.b32.xlu0 %v1028, 1
        %v1388 = vpop.permute.xlu0 %1387
        %1389 = vrot.lane.b32.xlu0 %v1029, 1
        %v1390 = vpop.permute.xlu0 %1389
        %1391 = vrot.lane.b32.xlu0 %v1030, 1
        %v1392 = vpop.permute.xlu0 %1391
        %1393 = vrot.lane.b32.xlu0 %v1031, 1
        %v1394 = vpop.permute.xlu0 %1393
        %1395 = vrot.lane.b32.xlu0 %v1032, 1
        %v1396 = vpop.permute.xlu0 %1395
        %1397 = vrot.lane.b32.xlu0 %v1033, 1
        %v1398 = vpop.permute.xlu0 %1397
        %1399 = vrot.lane.b32.xlu0 %v1034, 1
        %v1400 = vpop.permute.xlu0 %1399
        %1401 = vrot.lane.b32.xlu0 %v1035, 1
        %v1402 = vpop.permute.xlu0 %1401
        %1403 = vrot.lane.b32.xlu0 %v1036, 1
        %v1404 = vpop.permute.xlu0 %1403
        %1405 = vrot.lane.b32.xlu0 %v1037, 1
        %v1406 = vpop.permute.xlu0 %1405
        %1407 = vrot.lane.b32.xlu0 %v1038, 1
        %v1408 = vpop.permute.xlu0 %1407
        %1409 = vrot.lane.b32.xlu0 %v1039, 1
        %v1410 = vpop.permute.xlu0 %1409
        %1411 = vrot.lane.b32.xlu0 %v1040, 1
        %v1412 = vpop.permute.xlu0 %1411
        %1413 = vrot.lane.b32.xlu0 %v1041, 1
        %v1414 = vpop.permute.xlu0 %1413
        %1415 = vrot.lane.b32.xlu0 %v1042, 1
        %v1416 = vpop.permute.xlu0 %1415
        %1417 = vrot.lane.b32.xlu0 %v1043, 1
        %v1418 = vpop.permute.xlu0 %1417
        %1419 = vrot.lane.b32.xlu0 %v1044, 1
        %v1420 = vpop.permute.xlu0 %1419
        %1421 = vrot.lane.b32.xlu0 %v1045, 1
        %v1422 = vpop.permute.xlu0 %1421
        %1423 = vrot.lane.b32.xlu0 %v1046, 1
        %v1424 = vpop.permute.xlu0 %1423
        %1425 = vrot.lane.b32.xlu0 %v1047, 1
        %v1426 = vpop.permute.xlu0 %1425
        %1427 = vrot.lane.b32.xlu0 %v1048, 1
        %v1428 = vpop.permute.xlu0 %1427
        %1429 = vrot.lane.b32.xlu0 %v1049, 1
        %v1430 = vpop.permute.xlu0 %1429
        %1431 = vrot.lane.b32.xlu0 %v1050, 1
        %v1432 = vpop.permute.xlu0 %1431
        %1433 = vrot.lane.b32.xlu0 %v1051, 1
        %v1434 = vpop.permute.xlu0 %1433
        %1435 = vrot.lane.b32.xlu0 %v1052, 1
        %v1436 = vpop.permute.xlu0 %1435
        %1437 = vrot.lane.b32.xlu0 %v1053, 1
        %v1438 = vpop.permute.xlu0 %1437
        %v1471 = vsel %vm1182, 0.0, %v1376
        %v1472 = vsel %vm1182, 0.0, %v1378
        %v1473 = vsel %vm1182, 0.0, %v1380
        %v1474 = vsel %vm1182, 0.0, %v1382
        %v1475 = vsel %vm1182, 0.0, %v1384
        %v1476 = vsel %vm1182, 0.0, %v1386
        %v1477 = vsel %vm1182, 0.0, %v1388
        %v1478 = vsel %vm1182, 0.0, %v1390
        %v1479 = vsel %vm1182, 0.0, %v1392
        %v1480 = vsel %vm1182, 0.0, %v1394
        %v1481 = vsel %vm1182, 0.0, %v1396
        %v1482 = vsel %vm1182, 0.0, %v1398
        %v1483 = vsel %vm1182, 0.0, %v1400
        %v1484 = vsel %vm1182, 0.0, %v1402
        %v1485 = vsel %vm1182, 0.0, %v1404
        %v1486 = vsel %vm1182, 0.0, %v1406
        %v1487 = vsel %vm1182, 0.0, %v1408
        %v1488 = vsel %vm1182, 0.0, %v1410
        %v1489 = vsel %vm1182, 0.0, %v1412
        %v1490 = vsel %vm1182, 0.0, %v1414
        %v1491 = vsel %vm1182, 0.0, %v1416
        %v1492 = vsel %vm1182, 0.0, %v1418
        %v1493 = vsel %vm1182, 0.0, %v1420
        %v1494 = vsel %vm1182, 0.0, %v1422
        %v1495 = vsel %vm1182, 0.0, %v1424
        %v1496 = vsel %vm1182, 0.0, %v1426
        %v1497 = vsel %vm1182, 0.0, %v1428
        %v1498 = vsel %vm1182, 0.0, %v1430
        %v1499 = vsel %vm1182, 0.0, %v1432
        %v1500 = vsel %vm1182, 0.0, %v1434
        %v1501 = vsel %vm1182, 0.0, %v1436
        %v1502 = vsel %vm1182, 0.0, %v1438
        %v1503 = vmax.f32 %v669, %v670
        %v1504 = vmax.f32 %v673, %v674
        %v1505 = vmax.f32 %v677, %v678
        %v1506 = vmax.f32 %v681, %v682
        %v1507 = vmax.f32 %v685, %v686
        %v1508 = vmax.f32 %v689, %v690
        %v1509 = vmax.f32 %v693, %v694
        %v1510 = vmax.f32 %v697, %v698
        %v1511 = vmax.f32 %v701, %v702
        %v1512 = vmax.f32 %v705, %v706
        %v1513 = vmax.f32 %v709, %v710
        %v1514 = vmax.f32 %v713, %v714
        %v1515 = vmax.f32 %v717, %v718
        %v1516 = vmax.f32 %v721, %v722
        %v1517 = vmax.f32 %v725, %v726
        %v1518 = vmax.f32 %v729, %v730
        %v1519 = vmax.f32 %v733, %v734
        %v1520 = vmax.f32 %v737, %v738
        %v1521 = vmax.f32 %v741, %v742
        %v1522 = vmax.f32 %v745, %v746
        %v1523 = vmax.f32 %v749, %v750
        %v1524 = vmax.f32 %v753, %v754
        %v1525 = vmax.f32 %v757, %v758
        %v1526 = vmax.f32 %v761, %v762
        %v1527 = vmax.f32 %v765, %v766
        %v1528 = vmax.f32 %v769, %v770
        %v1529 = vmax.f32 %v773, %v774
        %v1530 = vmax.f32 %v777, %v778
        %v1531 = vmax.f32 %v781, %v782
        %v1532 = vmax.f32 %v785, %v786
        %v1533 = vmax.f32 %v789, %v790
        %v1534 = vmax.f32 %v793, %v794
        %v1535 = vmax.f32 %v1503, %v671
        %v1536 = vmax.f32 %v1504, %v675
        %v1537 = vmax.f32 %v1505, %v679
        %v1538 = vmax.f32 %v1506, %v683
        %v1539 = vmax.f32 %v1507, %v687
        %v1540 = vmax.f32 %v1508, %v691
        %v1541 = vmax.f32 %v1509, %v695
        %v1542 = vmax.f32 %v1510, %v699
        %v1543 = vmax.f32 %v1511, %v703
        %v1544 = vmax.f32 %v1512, %v707
        %v1545 = vmax.f32 %v1513, %v711
        %v1546 = vmax.f32 %v1514, %v715
        %v1547 = vmax.f32 %v1515, %v719
        %v1548 = vmax.f32 %v1516, %v723
        %v1549 = vmax.f32 %v1517, %v727
        %v1550 = vmax.f32 %v1518, %v731
        %v1551 = vmax.f32 %v1519, %v735
        %v1552 = vmax.f32 %v1520, %v739
        %v1553 = vmax.f32 %v1521, %v743
        %v1554 = vmax.f32 %v1522, %v747
        %v1555 = vmax.f32 %v1523, %v751
        %v1556 = vmax.f32 %v1524, %v755
        %v1557 = vmax.f32 %v1525, %v759
        %v1558 = vmax.f32 %v1526, %v763
        %v1559 = vmax.f32 %v1527, %v767
        %v1560 = vmax.f32 %v1528, %v771
        %v1561 = vmax.f32 %v1529, %v775
        %v1562 = vmax.f32 %v1530, %v779
        %v1563 = vmax.f32 %v1531, %v783
        %v1564 = vmax.f32 %v1532, %v787
        %v1565 = vmax.f32 %v1533, %v791
        %v1566 = vmax.f32 %v1534, %v795
        %v1567 = vmax.f32 %v1535, %v672
        %v1568 = vmax.f32 %v1536, %v676
        %v1569 = vmax.f32 %v1537, %v680
        %v1570 = vmax.f32 %v1538, %v684
        %v1571 = vmax.f32 %v1539, %v688
        %v1572 = vmax.f32 %v1540, %v692
        %v1573 = vmax.f32 %v1541, %v696
        %v1574 = vmax.f32 %v1542, %v700
        %v1575 = vmax.f32 %v1543, %v704
        %v1576 = vmax.f32 %v1544, %v708
        %v1577 = vmax.f32 %v1545, %v712
        %v1578 = vmax.f32 %v1546, %v716
        %v1579 = vmax.f32 %v1547, %v720
        %v1580 = vmax.f32 %v1548, %v724
        %v1581 = vmax.f32 %v1549, %v728
        %v1582 = vmax.f32 %v1550, %v732
        %v1583 = vmax.f32 %v1551, %v736
        %v1584 = vmax.f32 %v1552, %v740
        %v1585 = vmax.f32 %v1553, %v744
        %v1586 = vmax.f32 %v1554, %v748
        %v1587 = vmax.f32 %v1555, %v752
        %v1588 = vmax.f32 %v1556, %v756
        %v1589 = vmax.f32 %v1557, %v760
        %v1590 = vmax.f32 %v1558, %v764
        %v1591 = vmax.f32 %v1559, %v768
        %v1592 = vmax.f32 %v1560, %v772
        %v1593 = vmax.f32 %v1561, %v776
        %v1594 = vmax.f32 %v1562, %v780
        %v1595 = vmax.f32 %v1563, %v784
        %v1596 = vmax.f32 %v1564, %v788
        %v1597 = vmax.f32 %v1565, %v792
        %v1598 = vmax.f32 %v1566, %v796
        %v1599 = vmax.f32 %v1567, %v894
        %v1600 = vmax.f32 %v1568, %v895
        %v1601 = vmax.f32 %v1569, %v896
        %v1602 = vmax.f32 %v1570, %v897
        %v1603 = vmax.f32 %v1571, %v898
        %v1604 = vmax.f32 %v1572, %v899
        %v1605 = vmax.f32 %v1573, %v900
        %v1606 = vmax.f32 %v1574, %v901
        %v1607 = vmax.f32 %v1575, %v902
        %v1608 = vmax.f32 %v1576, %v903
        %v1609 = vmax.f32 %v1577, %v904
        %v1610 = vmax.f32 %v1578, %v905
        %v1611 = vmax.f32 %v1579, %v906
        %v1612 = vmax.f32 %v1580, %v907
        %v1613 = vmax.f32 %v1581, %v908
        %v1614 = vmax.f32 %v1582, %v909
        %v1615 = vmax.f32 %v1583, %v910
        %v1616 = vmax.f32 %v1584, %v911
        %v1617 = vmax.f32 %v1585, %v912
        %v1618 = vmax.f32 %v1586, %v913
        %v1619 = vmax.f32 %v1587, %v914
        %v1620 = vmax.f32 %v1588, %v915
        %v1621 = vmax.f32 %v1589, %v916
        %v1622 = vmax.f32 %v1590, %v917
        %v1623 = vmax.f32 %v1591, %v918
        %v1624 = vmax.f32 %v1592, %v919
        %v1625 = vmax.f32 %v1593, %v920
        %v1626 = vmax.f32 %v1594, %v921
        %v1627 = vmax.f32 %v1595, %v922
        %v1628 = vmax.f32 %v1596, %v923
        %v1629 = vmax.f32 %v1597, %v924
        %v1630 = vmax.f32 %v1598, %v925
        %v1631 = vmax.f32 %v1599, %v1022
        %v1632 = vmax.f32 %v1600, %v1023
        %v1633 = vmax.f32 %v1601, %v1024
        %v1634 = vmax.f32 %v1602, %v1025
        %v1635 = vmax.f32 %v1603, %v1026
        %v1636 = vmax.f32 %v1604, %v1027
        %v1637 = vmax.f32 %v1605, %v1028
        %v1638 = vmax.f32 %v1606, %v1029
        %v1639 = vmax.f32 %v1607, %v1030
        %v1640 = vmax.f32 %v1608, %v1031
        %v1641 = vmax.f32 %v1609, %v1032
        %v1642 = vmax.f32 %v1610, %v1033
        %v1643 = vmax.f32 %v1611, %v1034
        %v1644 = vmax.f32 %v1612, %v1035
        %v1645 = vmax.f32 %v1613, %v1036
        %v1646 = vmax.f32 %v1614, %v1037
        %v1647 = vmax.f32 %v1615, %v1038
        %v1648 = vmax.f32 %v1616, %v1039
        %v1649 = vmax.f32 %v1617, %v1040
        %v1650 = vmax.f32 %v1618, %v1041
        %v1651 = vmax.f32 %v1619, %v1042
        %v1652 = vmax.f32 %v1620, %v1043
        %v1653 = vmax.f32 %v1621, %v1044
        %v1654 = vmax.f32 %v1622, %v1045
        %v1655 = vmax.f32 %v1623, %v1046
        %v1656 = vmax.f32 %v1624, %v1047
        %v1657 = vmax.f32 %v1625, %v1048
        %v1658 = vmax.f32 %v1626, %v1049
        %v1659 = vmax.f32 %v1627, %v1050
        %v1660 = vmax.f32 %v1628, %v1051
        %v1661 = vmax.f32 %v1629, %v1052
        %v1662 = vmax.f32 %v1630, %v1053
        %v1663 = vmax.f32 %v1631, %v1183
        %v1664 = vmax.f32 %v1632, %v1184
        %v1665 = vmax.f32 %v1633, %v1185
        %v1666 = vmax.f32 %v1634, %v1186
        %v1667 = vmax.f32 %v1635, %v1187
        %v1668 = vmax.f32 %v1636, %v1188
        %v1669 = vmax.f32 %v1637, %v1189
        %v1670 = vmax.f32 %v1638, %v1190
        %v1671 = vmax.f32 %v1639, %v1191
        %v1672 = vmax.f32 %v1640, %v1192
        %v1673 = vmax.f32 %v1641, %v1193
        %v1674 = vmax.f32 %v1642, %v1194
        %v1675 = vmax.f32 %v1643, %v1195
        %v1676 = vmax.f32 %v1644, %v1196
        %v1677 = vmax.f32 %v1645, %v1197
        %v1678 = vmax.f32 %v1646, %v1198
        %v1679 = vmax.f32 %v1647, %v1199
        %v1680 = vmax.f32 %v1648, %v1200
        %v1681 = vmax.f32 %v1649, %v1201
        %v1682 = vmax.f32 %v1650, %v1202
        %v1683 = vmax.f32 %v1651, %v1203
        %v1684 = vmax.f32 %v1652, %v1204
        %v1685 = vmax.f32 %v1653, %v1205
        %v1686 = vmax.f32 %v1654, %v1206
        %v1687 = vmax.f32 %v1655, %v1207
        %v1688 = vmax.f32 %v1656, %v1208
        %v1689 = vmax.f32 %v1657, %v1209
        %v1690 = vmax.f32 %v1658, %v1210
        %v1691 = vmax.f32 %v1659, %v1211
        %v1692 = vmax.f32 %v1660, %v1212
        %v1693 = vmax.f32 %v1661, %v1213
        %v1694 = vmax.f32 %v1662, %v1214
        %v1695 = vmax.f32 %v1663, %v1311
        %v1696 = vmax.f32 %v1664, %v1312
        %v1697 = vmax.f32 %v1665, %v1313
        %v1698 = vmax.f32 %v1666, %v1314
        %v1699 = vmax.f32 %v1667, %v1315
        %v1700 = vmax.f32 %v1668, %v1316
        %v1701 = vmax.f32 %v1669, %v1317
        %v1702 = vmax.f32 %v1670, %v1318
        %v1703 = vmax.f32 %v1671, %v1319
        %v1704 = vmax.f32 %v1672, %v1320
        %v1705 = vmax.f32 %v1673, %v1321
        %v1706 = vmax.f32 %v1674, %v1322
        %v1707 = vmax.f32 %v1675, %v1323
        %v1708 = vmax.f32 %v1676, %v1324
        %v1709 = vmax.f32 %v1677, %v1325
        %v1710 = vmax.f32 %v1678, %v1326
        %v1711 = vmax.f32 %v1679, %v1327
        %v1712 = vmax.f32 %v1680, %v1328
        %v1713 = vmax.f32 %v1681, %v1329
        %v1714 = vmax.f32 %v1682, %v1330
        %v1715 = vmax.f32 %v1683, %v1331
        %v1716 = vmax.f32 %v1684, %v1332
        %v1717 = vmax.f32 %v1685, %v1333
        %v1718 = vmax.f32 %v1686, %v1334
        %v1719 = vmax.f32 %v1687, %v1335
        %v1720 = vmax.f32 %v1688, %v1336
        %v1721 = vmax.f32 %v1689, %v1337
        %v1722 = vmax.f32 %v1690, %v1338
        %v1723 = vmax.f32 %v1691, %v1339
        %v1724 = vmax.f32 %v1692, %v1340
        %v1725 = vmax.f32 %v1693, %v1341
        %v1726 = vmax.f32 %v1694, %v1342
        %v1727 = vmax.f32 %v1695, %v1471
        %v1728 = vmax.f32 %v1696, %v1472
        %v1729 = vmax.f32 %v1697, %v1473
        %v1730 = vmax.f32 %v1698, %v1474
        %v1731 = vmax.f32 %v1699, %v1475
        %v1732 = vmax.f32 %v1700, %v1476
        %v1733 = vmax.f32 %v1701, %v1477
        %v1734 = vmax.f32 %v1702, %v1478
        %v1735 = vmax.f32 %v1703, %v1479
        %v1736 = vmax.f32 %v1704, %v1480
        %v1737 = vmax.f32 %v1705, %v1481
        %v1738 = vmax.f32 %v1706, %v1482
        %v1739 = vmax.f32 %v1707, %v1483
        %v1740 = vmax.f32 %v1708, %v1484
        %v1741 = vmax.f32 %v1709, %v1485
        %v1742 = vmax.f32 %v1710, %v1486
        %v1743 = vmax.f32 %v1711, %v1487
        %v1744 = vmax.f32 %v1712, %v1488
        %v1745 = vmax.f32 %v1713, %v1489
        %v1746 = vmax.f32 %v1714, %v1490
        %v1747 = vmax.f32 %v1715, %v1491
        %v1748 = vmax.f32 %v1716, %v1492
        %v1749 = vmax.f32 %v1717, %v1493
        %v1750 = vmax.f32 %v1718, %v1494
        %v1751 = vmax.f32 %v1719, %v1495
        %v1752 = vmax.f32 %v1720, %v1496
        %v1753 = vmax.f32 %v1721, %v1497
        %v1754 = vmax.f32 %v1722, %v1498
        %v1755 = vmax.f32 %v1723, %v1499
        %v1756 = vmax.f32 %v1724, %v1500
        %v1757 = vmax.f32 %v1725, %v1501
        %v1758 = vmax.f32 %v1726, %v1502
        %vm1759 = vcmask 27648
        %v1760 = vsel %vm1759, %v1727, 0.0
        %v1761 = vsel %vm1759, %v1728, 0.0
        %v1762 = vadd.f32 %v1760, %v1761
        %v1763 = vsel %vm1759, %v1729, 0.0
        %v1764 = vadd.f32 %v1762, %v1763
        %v1765 = vsel %vm1759, %v1730, 0.0
        %v1766 = vadd.f32 %v1764, %v1765
        %v1767 = vsel %vm1759, %v1731, 0.0
        %v1768 = vadd.f32 %v1766, %v1767
        %v1769 = vsel %vm1759, %v1732, 0.0
        %v1770 = vadd.f32 %v1768, %v1769
        %v1771 = vsel %vm1759, %v1733, 0.0
        %v1772 = vadd.f32 %v1770, %v1771
        %v1773 = vsel %vm1759, %v1734, 0.0
        %v1774 = vadd.f32 %v1772, %v1773
        %v1775 = vsel %vm1759, %v1735, 0.0
        %v1776 = vadd.f32 %v1774, %v1775
        %v1777 = vsel %vm1759, %v1736, 0.0
        %v1778 = vadd.f32 %v1776, %v1777
        %v1779 = vsel %vm1759, %v1737, 0.0
        %v1780 = vadd.f32 %v1778, %v1779
        %v1781 = vsel %vm1759, %v1738, 0.0
        %v1782 = vadd.f32 %v1780, %v1781
        %v1783 = vsel %vm1759, %v1739, 0.0
        %v1784 = vadd.f32 %v1782, %v1783
        %v1785 = vsel %vm1759, %v1740, 0.0
        %v1786 = vadd.f32 %v1784, %v1785
        %v1787 = vsel %vm1759, %v1741, 0.0
        %v1788 = vadd.f32 %v1786, %v1787
        %v1789 = vsel %vm1759, %v1742, 0.0
        %v1790 = vadd.f32 %v1788, %v1789
        %v1791 = vsel %vm1759, %v1743, 0.0
        %v1792 = vadd.f32 %v1790, %v1791
        %v1793 = vsel %vm1759, %v1744, 0.0
        %v1794 = vadd.f32 %v1792, %v1793
        %v1795 = vsel %vm1759, %v1745, 0.0
        %v1796 = vadd.f32 %v1794, %v1795
        %v1797 = vsel %vm1759, %v1746, 0.0
        %v1798 = vadd.f32 %v1796, %v1797
        %v1799 = vsel %vm1759, %v1747, 0.0
        %v1800 = vadd.f32 %v1798, %v1799
        %v1801 = vsel %vm1759, %v1748, 0.0
        %v1802 = vadd.f32 %v1800, %v1801
        %v1803 = vsel %vm1759, %v1749, 0.0
        %v1804 = vadd.f32 %v1802, %v1803
        %v1805 = vsel %vm1759, %v1750, 0.0
        %v1806 = vadd.f32 %v1804, %v1805
        %v1807 = vsel %vm1759, %v1751, 0.0
        %v1808 = vadd.f32 %v1806, %v1807
        %v1809 = vsel %vm1759, %v1752, 0.0
        %v1810 = vadd.f32 %v1808, %v1809
        %v1811 = vsel %vm1759, %v1753, 0.0
        %v1812 = vadd.f32 %v1810, %v1811
        %v1813 = vsel %vm1759, %v1754, 0.0
        %v1814 = vadd.f32 %v1812, %v1813
        %v1815 = vsel %vm1759, %v1755, 0.0
        %v1816 = vadd.f32 %v1814, %v1815
        %v1817 = vsel %vm1759, %v1756, 0.0
        %v1818 = vadd.f32 %v1816, %v1817
        %v1819 = vsel %vm1759, %v1757, 0.0
        %v1820 = vadd.f32 %v1818, %v1819
        %v1821 = vsel %vm1759, %v1758, 0.0
        %v1822 = vadd.f32 %v1820, %v1821
        %v1823 = vrcp.pop 32.0
        %v1824 = vmul.f32 32.0, %v1823
        %v1825 = vsub.f32 1.0, %v1824
        %v1826 = vmul.f32 %v1823, %v1825
        %v1827 = vadd.f32 %v1823, %v1826
        %vm1828 = vweird.f32 %v1823
        %v1829 = vsel %vm1828, %v1823, %v1827
        %v1830 = vmul.f32 %v1822, %v1829
        %v1831 = vsub.f32 %v1727, %v1830
        %v1832 = vsub.f32 %v1728, %v1830
        %v1833 = vsub.f32 %v1729, %v1830
        %v1834 = vsub.f32 %v1730, %v1830
        %v1835 = vsub.f32 %v1731, %v1830
        %v1836 = vsub.f32 %v1732, %v1830
        %v1837 = vsub.f32 %v1733, %v1830
        %v1838 = vsub.f32 %v1734, %v1830
        %v1839 = vsub.f32 %v1735, %v1830
        %v1840 = vsub.f32 %v1736, %v1830
        %v1841 = vsub.f32 %v1737, %v1830
        %v1842 = vsub.f32 %v1738, %v1830
        %v1843 = vsub.f32 %v1739, %v1830
        %v1844 = vsub.f32 %v1740, %v1830
        %v1845 = vsub.f32 %v1741, %v1830
        %v1846 = vsub.f32 %v1742, %v1830
        %v1847 = vsub.f32 %v1743, %v1830
        %v1848 = vsub.f32 %v1744, %v1830
        %v1849 = vsub.f32 %v1745, %v1830
        %v1850 = vsub.f32 %v1746, %v1830
        %v1851 = vsub.f32 %v1747, %v1830
        %v1852 = vsub.f32 %v1748, %v1830
        %v1853 = vsub.f32 %v1749, %v1830
        %v1854 = vsub.f32 %v1750, %v1830
        %v1855 = vsub.f32 %v1751, %v1830
        %v1856 = vsub.f32 %v1752, %v1830
        %v1857 = vsub.f32 %v1753, %v1830
        %v1858 = vsub.f32 %v1754, %v1830
        %v1859 = vsub.f32 %v1755, %v1830
        %v1860 = vsub.f32 %v1756, %v1830
        %v1861 = vsub.f32 %v1757, %v1830
        %v1862 = vsub.f32 %v1758, %v1830
        %v1863 = vmul.f32 %v1831, %v1831
        %v1864 = vmul.f32 %v1832, %v1832
        %v1865 = vmul.f32 %v1833, %v1833
        %v1866 = vmul.f32 %v1834, %v1834
        %v1867 = vmul.f32 %v1835, %v1835
        %v1868 = vmul.f32 %v1836, %v1836
        %v1869 = vmul.f32 %v1837, %v1837
        %v1870 = vmul.f32 %v1838, %v1838
        %v1871 = vmul.f32 %v1839, %v1839
        %v1872 = vmul.f32 %v1840, %v1840
        %v1873 = vmul.f32 %v1841, %v1841
        %v1874 = vmul.f32 %v1842, %v1842
        %v1875 = vmul.f32 %v1843, %v1843
        %v1876 = vmul.f32 %v1844, %v1844
        %v1877 = vmul.f32 %v1845, %v1845
        %v1878 = vmul.f32 %v1846, %v1846
        %v1879 = vmul.f32 %v1847, %v1847
        %v1880 = vmul.f32 %v1848, %v1848
        %v1881 = vmul.f32 %v1849, %v1849
        %v1882 = vmul.f32 %v1850, %v1850
        %v1883 = vmul.f32 %v1851, %v1851
        %v1884 = vmul.f32 %v1852, %v1852
        %v1885 = vmul.f32 %v1853, %v1853
        %v1886 = vmul.f32 %v1854, %v1854
        %v1887 = vmul.f32 %v1855, %v1855
        %v1888 = vmul.f32 %v1856, %v1856
        %v1889 = vmul.f32 %v1857, %v1857
        %v1890 = vmul.f32 %v1858, %v1858
        %v1891 = vmul.f32 %v1859, %v1859
        %v1892 = vmul.f32 %v1860, %v1860
        %v1893 = vmul.f32 %v1861, %v1861
        %v1894 = vmul.f32 %v1862, %v1862
        %v1895 = vsel %vm1759, %v1863, 0.0
        %v1896 = vsel %vm1759, %v1864, 0.0
        %v1897 = vadd.f32 %v1895, %v1896
        %v1898 = vsel %vm1759, %v1865, 0.0
        %v1899 = vadd.f32 %v1897, %v1898
        %v1900 = vsel %vm1759, %v1866, 0.0
        %v1901 = vadd.f32 %v1899, %v1900
        %v1902 = vsel %vm1759, %v1867, 0.0
        %v1903 = vadd.f32 %v1901, %v1902
        %v1904 = vsel %vm1759, %v1868, 0.0
        %v1905 = vadd.f32 %v1903, %v1904
        %v1906 = vsel %vm1759, %v1869, 0.0
        %v1907 = vadd.f32 %v1905, %v1906
        %v1908 = vsel %vm1759, %v1870, 0.0
        %v1909 = vadd.f32 %v1907, %v1908
        %v1910 = vsel %vm1759, %v1871, 0.0
        %v1911 = vadd.f32 %v1909, %v1910
        %v1912 = vsel %vm1759, %v1872, 0.0
        %v1913 = vadd.f32 %v1911, %v1912
        %v1914 = vsel %vm1759, %v1873, 0.0
        %v1915 = vadd.f32 %v1913, %v1914
        %v1916 = vsel %vm1759, %v1874, 0.0
        %v1917 = vadd.f32 %v1915, %v1916
        %v1918 = vsel %vm1759, %v1875, 0.0
        %v1919 = vadd.f32 %v1917, %v1918
        %v1920 = vsel %vm1759, %v1876, 0.0
        %v1921 = vadd.f32 %v1919, %v1920
        %v1922 = vsel %vm1759, %v1877, 0.0
        %v1923 = vadd.f32 %v1921, %v1922
        %v1924 = vsel %vm1759, %v1878, 0.0
        %v1925 = vadd.f32 %v1923, %v1924
        %v1926 = vsel %vm1759, %v1879, 0.0
        %v1927 = vadd.f32 %v1925, %v1926
        %v1928 = vsel %vm1759, %v1880, 0.0
        %v1929 = vadd.f32 %v1927, %v1928
        %v1930 = vsel %vm1759, %v1881, 0.0
        %v1931 = vadd.f32 %v1929, %v1930
        %v1932 = vsel %vm1759, %v1882, 0.0
        %v1933 = vadd.f32 %v1931, %v1932
        %v1934 = vsel %vm1759, %v1883, 0.0
        %v1935 = vadd.f32 %v1933, %v1934
        %v1936 = vsel %vm1759, %v1884, 0.0
        %v1937 = vadd.f32 %v1935, %v1936
        %v1938 = vsel %vm1759, %v1885, 0.0
        %v1939 = vadd.f32 %v1937, %v1938
        %v1940 = vsel %vm1759, %v1886, 0.0
        %v1941 = vadd.f32 %v1939, %v1940
        %v1942 = vsel %vm1759, %v1887, 0.0
        %v1943 = vadd.f32 %v1941, %v1942
        %v1944 = vsel %vm1759, %v1888, 0.0
        %v1945 = vadd.f32 %v1943, %v1944
        %v1946 = vsel %vm1759, %v1889, 0.0
        %v1947 = vadd.f32 %v1945, %v1946
        %v1948 = vsel %vm1759, %v1890, 0.0
        %v1949 = vadd.f32 %v1947, %v1948
        %v1950 = vsel %vm1759, %v1891, 0.0
        %v1951 = vadd.f32 %v1949, %v1950
        %v1952 = vsel %vm1759, %v1892, 0.0
        %v1953 = vadd.f32 %v1951, %v1952
        %v1954 = vsel %vm1759, %v1893, 0.0
        %v1955 = vadd.f32 %v1953, %v1954
        %v1956 = vsel %vm1759, %v1894, 0.0
        %v1957 = vadd.f32 %v1955, %v1956
        %v1958 = vmul.f32 %v1957, %v1829
        %v1959 = vadd.f32 %v1958, 1e-05
        %v1960 = vrsqrt.pop %v1959
        %v1961 = vmul.f32 %v1960, %v1959
        %v1962 = vmul.f32 %v1961, %v1960
        %v1963 = vmul.f32 0.5, %v1962
        %v1964 = vsub.f32 1.5, %v1963
        %v1965 = vmul.f32 %v1960, %v1964
        %vm1966 = vweird.f32 %v1959
        %vm1967 = vweird.f32 %v1960
        %vm1968 = vmor %vm1966, %vm1967
        %v1969 = vsel %vm1968, %v1960, %v1965
        %v1970 = vmul.f32 %v1831, %v1969
        %v1971 = vmul.f32 %v1832, %v1969
        %v1972 = vmul.f32 %v1833, %v1969
        %v1973 = vmul.f32 %v1834, %v1969
        %v1974 = vmul.f32 %v1835, %v1969
        %v1975 = vmul.f32 %v1836, %v1969
        %v1976 = vmul.f32 %v1837, %v1969
        %v1977 = vmul.f32 %v1838, %v1969
        %v1978 = vmul.f32 %v1839, %v1969
        %v1979 = vmul.f32 %v1840, %v1969
        %v1980 = vmul.f32 %v1841, %v1969
        %v1981 = vmul.f32 %v1842, %v1969
        %v1982 = vmul.f32 %v1843, %v1969
        %v1983 = vmul.f32 %v1844, %v1969
        %v1984 = vmul.f32 %v1845, %v1969
        %v1985 = vmul.f32 %v1846, %v1969
        %v1986 = vmul.f32 %v1847, %v1969
        %v1987 = vmul.f32 %v1848, %v1969
        %v1988 = vmul.f32 %v1849, %v1969
        %v1989 = vmul.f32 %v1850, %v1969
        %v1990 = vmul.f32 %v1851, %v1969
        %v1991 = vmul.f32 %v1852, %v1969
        %v1992 = vmul.f32 %v1853, %v1969
        %v1993 = vmul.f32 %v1854, %v1969
        %v1994 = vmul.f32 %v1855, %v1969
        %v1995 = vmul.f32 %v1856, %v1969
        %v1996 = vmul.f32 %v1857, %v1969
        %v1997 = vmul.f32 %v1858, %v1969
        %v1998 = vmul.f32 %v1859, %v1969
        %v1999 = vmul.f32 %v1860, %v1969
        %v2000 = vmul.f32 %v1861, %v1969
        %v2001 = vmul.f32 %v1862, %v1969
        %2002 = vst.msk [vmem:[%s668] sm:$0xf] %vm1759, %v1970
        %2003 = vst.msk [vmem:[%s668 + $0x4] sm:$0xf] %vm1759, %v1971
        %2004 = vst.msk [vmem:[%s668 + $0x8] sm:$0xf] %vm1759, %v1972
        %2005 = vst.msk [vmem:[%s668 + $0xc] sm:$0xf] %vm1759, %v1973
        %2006 = vst.msk [vmem:[%s668 + $0x10] sm:$0xf] %vm1759, %v1974
        %2007 = vst.msk [vmem:[%s668 + $0x14] sm:$0xf] %vm1759, %v1975
        %2008 = vst.msk [vmem:[%s668 + $0x18] sm:$0xf] %vm1759, %v1976
        %2009 = vst.msk [vmem:[%s668 + $0x1c] sm:$0xf] %vm1759, %v1977
        %2010 = vst.msk [vmem:[%s668 + $0x20] sm:$0xf] %vm1759, %v1978
        %2011 = vst.msk [vmem:[%s668 + $0x24] sm:$0xf] %vm1759, %v1979
        %2012 = vst.msk [vmem:[%s668 + $0x28] sm:$0xf] %vm1759, %v1980
        %2013 = vst.msk [vmem:[%s668 + $0x2c] sm:$0xf] %vm1759, %v1981
        %2014 = vst.msk [vmem:[%s668 + $0x30] sm:$0xf] %vm1759, %v1982
        %2015 = vst.msk [vmem:[%s668 + $0x34] sm:$0xf] %vm1759, %v1983
        %2016 = vst.msk [vmem:[%s668 + $0x38] sm:$0xf] %vm1759, %v1984
        %2017 = vst.msk [vmem:[%s668 + $0x3c] sm:$0xf] %vm1759, %v1985
        %2018 = vst.msk [vmem:[%s668 + $0x40] sm:$0xf] %vm1759, %v1986
        %2019 = vst.msk [vmem:[%s668 + $0x44] sm:$0xf] %vm1759, %v1987
        %2020 = vst.msk [vmem:[%s668 + $0x48] sm:$0xf] %vm1759, %v1988
        %2021 = vst.msk [vmem:[%s668 + $0x4c] sm:$0xf] %vm1759, %v1989
        %2022 = vst.msk [vmem:[%s668 + $0x50] sm:$0xf] %vm1759, %v1990
        %2023 = vst.msk [vmem:[%s668 + $0x54] sm:$0xf] %vm1759, %v1991
        %2024 = vst.msk [vmem:[%s668 + $0x58] sm:$0xf] %vm1759, %v1992
        %2025 = vst.msk [vmem:[%s668 + $0x5c] sm:$0xf] %vm1759, %v1993
        %2026 = vst.msk [vmem:[%s668 + $0x60] sm:$0xf] %vm1759, %v1994
        %2027 = vst.msk [vmem:[%s668 + $0x64] sm:$0xf] %vm1759, %v1995
        %2028 = vst.msk [vmem:[%s668 + $0x68] sm:$0xf] %vm1759, %v1996
        %2029 = vst.msk [vmem:[%s668 + $0x6c] sm:$0xf] %vm1759, %v1997
        %2030 = vst.msk [vmem:[%s668 + $0x70] sm:$0xf] %vm1759, %v1998
        %2031 = vst.msk [vmem:[%s668 + $0x74] sm:$0xf] %vm1759, %v1999
        %2032 = vst.msk [vmem:[%s668 + $0x78] sm:$0xf] %vm1759, %v2000
        %2033 = vst.msk [vmem:[%s668 + $0x7c] sm:$0xf] %vm1759, %v2001
        %p2034 = scmp.lt.s32.totalorder %s12, 1
        %s2035 = scalar_select %p2034, %s12, 1
        %s2036 = smul.addr %s2035, 32
        %s2037 = smul.addr %s2036, 4
        %s2038 = scalar_lea.vmem %s1, %s2037
        // Predicated region
        $region66: #{early_convolution.3} parent=60 // pred_check
          %p2039 = pneg %p56
        $region67: #{early_convolution.3} parent=60 // pred_check_branch
          %2041 = sbr.rel (%p2039) target = $region69
        $region68: #{early_convolution.3} parent=60 // pred_region
          _
        $region69: #{early_convolution.3} parent=60 // pred_fallthru
          _
      $region61: #{early_convolution.3} parent=5 // pred_fallthru
        _
      %p2042 = scmp.le.s32.totalorder 2, %s7
      // Predicated region
      $region70: #{early_convolution.3} parent=5 // pred_check
        %p2043 = pneg %p2042
      $region71: #{early_convolution.3} parent=5 // pred_check_branch
        %2045 = sbr.rel (%p2043) target = $region73
      $region72: #{early_convolution.3} parent=5 // pred_region
        %s2046 = ssub.s32 %s7, 2
        // Predicated region
        $region74: #{early_convolution.3} parent=72 // pred_check
          %p2047 = pneg %p62
        $region75: #{early_convolution.3} parent=72 // pred_check_branch
          %2049 = sbr.rel (%p2047) target = $region77
        $region76: #{early_convolution.3} parent=72 // pred_region
          %p2050 = scmp.lt.s32.totalorder %s13, 1
          %s2051 = scalar_select %p2050, %s13, 1
          %s2052 = smul.addr %s2051, 32
          %s2053 = smul.addr %s2052, 4
          %s2054 = scalar_lea.vmem %s1, %s2053
        $region77: #{early_convolution.3} parent=72 // pred_fallthru
          _
      $region73: #{early_convolution.3} parent=5 // pred_fallthru
        _
    $region6: #{early_convolution.3} parent=1 // loop_footer
      %s11 = sadd.s32 1, %s7
    $region7: #{early_convolution.3} parent=1 // loop_footer_branch
      %6 = sbr.rel target = $region3
    $region8: #{early_convolution.3} parent=1 // loop_exit
      _

</llo_original>
